<compile_context>
chip_gen: v7x
topology: tpu7x:2x2x1
jax: 0.10.0
libtpu: 0.0.40
codegen_flags: <defaults>
</compile_context>

<pallas_src>
import functools

import jax
import jax.numpy as jnp
from jax.experimental import pallas as pl
from jax.experimental.pallas import tpu as pltpu  # noqa: F401  (kept for parity)

# ---- "parameters" from the original codebase (small, synthetic) --------------
NUM_HAND_CONTROL_POINTS = 5       # hand_pose_dim   = 15
NUM_OBJECT_CONTROL_POINTS = 3     # object_pose_dim = 9
HAND_POSE_DIM = NUM_HAND_CONTROL_POINTS * 3
OBJECT_POSE_DIM = NUM_OBJECT_CONTROL_POINTS * 3
INPUT_DIM = HAND_POSE_DIM + OBJECT_POSE_DIM   # 24
FC_HIDDEN = 32
LSTM_LAYERS = 2
LSTM_HIDDEN = 32
NUM_ACTIONS = 8
NUM_OBJECTS = 8
OUT_DIM = NUM_ACTIONS + NUM_OBJECTS           # 16
SEQ_LEN = 8
G = 4 * LSTM_HIDDEN                            # 128 gate lanes = one lane tile

# ---- packed-parameter row layout (every section starts on an 8-row boundary) -
# PACK_COLS = 256 so the fused [Wih1 | Whh0] block is a single contiguous
# 256-lane operand (fills the v6e/v7x MXU width; Mosaic splits it on v5e).
_FC_W_R0 = 0      # rows [  0, 24)  cols [0, 32)    fc.weight^T          (24, 32)
_FC_B_R  = 24     # row   24        cols [0, 32)    fc.bias              (1, 32)
_W0W1_R0 = 32     # rows [ 32, 64)  cols [0,128)=Wih0^T*s  [128,256)=Whh1^T*s
_B_R     = 64     # row   64        cols [0,128)=(bih0+bhh0)*s  [128,256)=(bih1+bhh1)*s
_WFUSE_R0 = 72    # rows [ 72,104)  cols [0,128)=Wih1^T*s  [128,256)=Whh0^T*s
_FFW_R0  = 104    # rows [104,136)  cols [0,128)    fc_final.weight^T, zero-padded (32,128)
_FFB_R   = 136    # row  136        cols [0,128)    fc_final.bias, zero-padded (1,128)
PACK_ROWS = 144
PACK_COLS = 256


def _interaction_rnn_kernel(x_ref, p_ref, out_ref, *, T, B):
    H = LSTM_HIDDEN

    # ---- parameter sub-views, loaded exactly once (hoisted out of the loop) --
    fc_w   = p_ref[_FC_W_R0:_FC_W_R0 + INPUT_DIM, 0:FC_HIDDEN]   # (24, 32)
    fc_b   = p_ref[_FC_B_R:_FC_B_R + 1, 0:FC_HIDDEN]             # (1, 32)
    wih0   = p_ref[_W0W1_R0:_W0W1_R0 + FC_HIDDEN, 0:G]           # (32, 128) scaled
    whh1   = p_ref[_W0W1_R0:_W0W1_R0 + H, G:2 * G]               # (32, 128) scaled
    b0     = p_ref[_B_R:_B_R + 1, 0:G]                           # (1, 128)  scaled
    b1     = p_ref[_B_R:_B_R + 1, G:2 * G]                       # (1, 128)  scaled
    wfused = p_ref[_WFUSE_R0:_WFUSE_R0 + H, :]                   # (32, 256) [Wih1|Whh0] scaled
    ff_w   = p_ref[_FFW_R0:_FFW_R0 + H, 0:G]                     # (32, 128) padded
    ff_b   = p_ref[_FFB_R:_FFB_R + 1, 0:G]                       # (1, 128)  padded

    # ---- fc + ReLU, all timesteps/sequences at once ---------------------------
    x = x_ref[...]                                                # (T*B, 24), (t, b)-major
    fc_out = jnp.maximum(
        jnp.dot(x, fc_w, preferred_element_type=jnp.float32) + fc_b, 0.0)   # (T*B, 32)

    # ---- layer-0 input-gate contribution hoisted off the serial chain ---------
    xg0 = jnp.dot(fc_out, wih0, preferred_element_type=jnp.float32) + b0    # (T*B, 128)

    h1_seq = []

    # ------------------------- peeled t = 0 (all states zero) ------------------
    g0 = xg0[0:B, :]                              # no h0@Whh0 term (h0 == 0)
    t0 = jnp.tanh(g0)                             # single EUP pass over the gate vreg
    s0 = 0.5 * t0 + 0.5                           # sigmoid gates (i/f/o lanes carry x/2)
    c0 = s0[:, 0:H] * t0[:, 2 * H:3 * H]          # f*c_prev == 0
    h0 = s0[:, 3 * H:4 * H] * jnp.tanh(c0)

    fused = jnp.dot(h0, wfused, preferred_element_type=jnp.float32)   # (B, 256)
    g1 = fused[:, 0:G] + b1                       # no h1@Whh1 term (h1 == 0)
    t1 = jnp.tanh(g1)
    s1 = 0.5 * t1 + 0.5
    c1 = s1[:, 0:H] * t1[:, 2 * H:3 * H]
    h1 = s1[:, 3 * H:4 * H] * jnp.tanh(c1)
    h1_seq.append(h1)

    if T > 1:
        rec0 = fused[:, G:2 * G]                  # layer-0 recurrent term for t=1
        rec1 = jnp.dot(h1, whh1, preferred_element_type=jnp.float32) + b1  # off-chain

    # ------------------------- t = 1 .. T-1 (fully unrolled) -------------------
    for t in range(1, T):
        # layer 0: only a VPU add sits on the chain (recurrent matmul came from
        # the previous step's fused push)
        g0 = xg0[t * B:(t + 1) * B, :] + rec0
        t0 = jnp.tanh(g0)
        s0 = 0.5 * t0 + 0.5
        c0 = s0[:, H:2 * H] * c0 + s0[:, 0:H] * t0[:, 2 * H:3 * H]
        h0 = s0[:, 3 * H:4 * H] * jnp.tanh(c0)

        # single on-chain MXU push: [layer-1 input term | layer-0 term for t+1]
        fused = jnp.dot(h0, wfused, preferred_element_type=jnp.float32)
        g1 = fused[:, 0:G] + rec1
        t1 = jnp.tanh(g1)
        s1 = 0.5 * t1 + 0.5
        c1 = s1[:, H:2 * H] * c1 + s1[:, 0:H] * t1[:, 2 * H:3 * H]
        h1 = s1[:, 3 * H:4 * H] * jnp.tanh(c1)
        h1_seq.append(h1)

        if t + 1 < T:
            rec0 = fused[:, G:2 * G]
            # h1@Whh1 is only needed at step t+1's layer 1 -> hidden behind
            # step t+1's layer-0 work (off the critical chain).
            rec1 = jnp.dot(h1, whh1, preferred_element_type=jnp.float32) + b1

    # ---- final projection: vreg-resident hidden stack, lane-dense output ------
    hcat = jnp.concatenate(h1_seq, axis=0)        # (T*B, 32) sublane stack, no VMEM scratch
    out_ref[...] = (jnp.dot(hcat, ff_w, preferred_element_type=jnp.float32) + ff_b)


def _run_packed(x_flat, packed_params, T, B):
    kernel = functools.partial(_interaction_rnn_kernel, T=T, B=B)
    return pl.pallas_call(
        kernel,
        out_shape=jax.ShapeDtypeStruct((T * B, G), jnp.float32),   # lane-dense (128-wide)
    )(x_flat, packed_params)


def interaction_rnn_forward_batched(x_btd, packed_params):
    """x_btd: (B, T, INPUT_DIM) f32 — B independent sequences batched into M."""
    B, T, D = x_btd.shape
    x_flat = jnp.transpose(x_btd, (1, 0, 2)).reshape(T * B, D)     # (t, b)-major
    out = _run_packed(x_flat, packed_params, T, B)                 # (T*B, 128)
    full = out[:, :OUT_DIM].reshape(T, B, OUT_DIM).transpose(1, 0, 2)   # (B, T, 16)
    # Faithful to the PyTorch code: (out[:, :num_actions], out[:, num_objects:]).
    # The two halves only coincide because NUM_ACTIONS == NUM_OBJECTS == 8.
    return full[..., :NUM_ACTIONS], full[..., NUM_OBJECTS:]


def interaction_rnn_forward(x, packed_params):
    """Module-faithful path: x (T, INPUT_DIM), hard-coded batch_size = 1."""
    act, obj = interaction_rnn_forward_batched(x[None], packed_params)
    return act[0], obj[0]


# ---- parameter construction / packing ----------------------------------------
def make_raw_params(key):
    """Deterministic synthetic parameters mirroring the nn.Module shapes."""
    ks = jax.random.split(key, 12)
    scale = 0.1
    return dict(
        fc_w=scale * jax.random.normal(ks[0], (FC_HIDDEN, INPUT_DIM), jnp.float32),
        fc_b=scale * jax.random.normal(ks[1], (FC_HIDDEN,), jnp.float32),
        wih0=scale * jax.random.normal(ks[2], (G, FC_HIDDEN), jnp.float32),
        whh0=scale * jax.random.normal(ks[3], (G, LSTM_HIDDEN), jnp.float32),
        bih0=scale * jax.random.normal(ks[4], (G,), jnp.float32),
        bhh0=scale * jax.random.normal(ks[5], (G,), jnp.float32),
        wih1=scale * jax.random.normal(ks[6], (G, LSTM_HIDDEN), jnp.float32),
        whh1=scale * jax.random.normal(ks[7], (G, LSTM_HIDDEN), jnp.float32),
        bih1=scale * jax.random.normal(ks[8], (G,), jnp.float32),
        bhh1=scale * jax.random.normal(ks[9], (G,), jnp.float32),
        ff_w=scale * jax.random.normal(ks[10], (OUT_DIM, LSTM_HIDDEN), jnp.float32),
        ff_b=scale * jax.random.normal(ks[11], (OUT_DIM,), jnp.float32),
    )


def pack_params(p):
    """Pack all weights/biases (pre-transposed, bih+bhh fused, 0.5 folded into
    the i/f/o gate columns so the kernel needs a single tanh per cell) into one
    (PACK_ROWS, PACK_COLS) buffer."""
    H = LSTM_HIDDEN
    # gate order i, f, g, o; sigmoid(x) = 0.5*tanh(x/2) + 0.5 -> scale i/f/o by 0.5
    s = jnp.concatenate([0.5 * jnp.ones(2 * H), jnp.ones(H), 0.5 * jnp.ones(H)]
                        ).astype(jnp.float32)                       # (128,)
    P = jnp.zeros((PACK_ROWS, PACK_COLS), jnp.float32)
    P = P.at[_FC_W_R0:_FC_W_R0 + INPUT_DIM, 0:FC_HIDDEN].set(p["fc_w"].T)
    P = P.at[_FC_B_R, 0:FC_HIDDEN].set(p["fc_b"])
    P = P.at[_W0W1_R0:_W0W1_R0 + FC_HIDDEN, 0:G].set(p["wih0"].T * s[None, :])
    P = P.at[_W0W1_R0:_W0W1_R0 + H, G:2 * G].set(p["whh1"].T * s[None, :])
    P = P.at[_B_R, 0:G].set((p["bih0"] + p["bhh0"]) * s)
    P = P.at[_B_R, G:2 * G].set((p["bih1"] + p["bhh1"]) * s)
    P = P.at[_WFUSE_R0:_WFUSE_R0 + H, 0:G].set(p["wih1"].T * s[None, :])
    P = P.at[_WFUSE_R0:_WFUSE_R0 + H, G:2 * G].set(p["whh0"].T * s[None, :])
    P = P.at[_FFW_R0:_FFW_R0 + H, 0:OUT_DIM].set(p["ff_w"].T)       # zero-padded to 128 lanes
    P = P.at[_FFB_R, 0:OUT_DIM].set(p["ff_b"])
    return P


# ---- pure-JAX reference reproducing the PyTorch forward -----------------------
def reference_forward(x, p):
    H = LSTM_HIDDEN
    out = jnp.maximum(x @ p["fc_w"].T + p["fc_b"], 0.0)
    layers = ((p["wih0"], p["whh0"], p["bih0"], p["bhh0"]),
              (p["wih1"], p["whh1"], p["bih1"], p["bhh1"]))
    hs = [jnp.zeros((1, H), jnp.float32) for _ in layers]
    cs = [jnp.zeros((1, H), jnp.float32) for _ in layers]
    seq = []
    for t in range(x.shape[0]):
        inp = out[t:t + 1]
        for l, (wih, whh, bih, bhh) in enumerate(layers):
            g = inp @ wih.T + hs[l] @ whh.T + bih + bhh
            i = jax.nn.sigmoid(g[:, :H]); f = jax.nn.sigmoid(g[:, H:2 * H])
            gg = jnp.tanh(g[:, 2 * H:3 * H]); o = jax.nn.sigmoid(g[:, 3 * H:])
            cs[l] = f * cs[l] + i * gg
            hs[l] = o * jnp.tanh(cs[l])
            inp = hs[l]
        seq.append(inp)
    lstm_out = jnp.concatenate(seq, axis=0)
    final = lstm_out @ p["ff_w"].T + p["ff_b"]
    return final[:, :NUM_ACTIONS], final[:, NUM_OBJECTS:]


if __name__ == "__main__":
    key = jax.random.PRNGKey(0)
    k_x, k_p, k_xb = jax.random.split(key, 3)
    raw = make_raw_params(k_p)
    packed = pack_params(raw)

    # --- module-faithful path (batch_size = 1, as the PyTorch forward) ---------
    x = jax.random.normal(k_x, (SEQ_LEN, INPUT_DIM), jnp.float32)
    act, obj = interaction_rnn_forward(x, packed)
    jax.block_until_ready((act, obj))

    ref_act, ref_obj = reference_forward(x, raw)
    assert act.shape == (SEQ_LEN, NUM_ACTIONS)
    assert obj.shape == (SEQ_LEN, OUT_DIM - NUM_OBJECTS)
    assert jnp.allclose(act, ref_act, atol=1e-4, rtol=1e-4)
    assert jnp.allclose(obj, ref_obj, atol=1e-4, rtol=1e-4)

    # --- batched path (perf lever: B independent sequences in the M dim) -------
    B_DEMO = 4
    xb = jax.random.normal(k_xb, (B_DEMO, SEQ_LEN, INPUT_DIM), jnp.float32)
    actb, objb = interaction_rnn_forward_batched(xb, packed)
    jax.block_until_ready((actb, objb))
    for b in range(B_DEMO):
        ra, ro = reference_forward(xb[b], raw)
        assert jnp.allclose(actb[b], ra, atol=1e-4, rtol=1e-4)
        assert jnp.allclose(objb[b], ro, atol=1e-4, rtol=1e-4)

    print("KERNEL_OK")
</pallas_src>

<mosaic_0001>
module attributes {stable_mosaic.version = 11 : i64} {
  func.func @_interaction_rnn_kernel(%arg0: memref<8x24xf32, #tpu.memory_space<vmem>>, %arg1: memref<144x256xf32, #tpu.memory_space<vmem>>, %arg2: memref<8x128xf32, #tpu.memory_space<vmem>>) attributes {dimension_semantics = [], scalar_prefetch = 0 : i64, scratch_operands = 0 : i64, tpu.core_type = #tpu.core_type<tc>} {
    %c0 = arith.constant 0 : index
    %c0_0 = arith.constant 0 : index
    %0 = vector.load %arg1[%c0, %c0_0] : memref<144x256xf32, #tpu.memory_space<vmem>>, vector<24x32xf32>
    %c24 = arith.constant 24 : index
    %c0_1 = arith.constant 0 : index
    %1 = vector.load %arg1[%c24, %c0_1] : memref<144x256xf32, #tpu.memory_space<vmem>>, vector<1x32xf32>
    %c32 = arith.constant 32 : index
    %c0_2 = arith.constant 0 : index
    %2 = vector.load %arg1[%c32, %c0_2] : memref<144x256xf32, #tpu.memory_space<vmem>>, vector<32x128xf32>
    %c32_3 = arith.constant 32 : index
    %c128 = arith.constant 128 : index
    %3 = vector.load %arg1[%c32_3, %c128] : memref<144x256xf32, #tpu.memory_space<vmem>>, vector<32x128xf32>
    %c64 = arith.constant 64 : index
    %c0_4 = arith.constant 0 : index
    %4 = vector.load %arg1[%c64, %c0_4] : memref<144x256xf32, #tpu.memory_space<vmem>>, vector<1x128xf32>
    %c64_5 = arith.constant 64 : index
    %c128_6 = arith.constant 128 : index
    %5 = vector.load %arg1[%c64_5, %c128_6] : memref<144x256xf32, #tpu.memory_space<vmem>>, vector<1x128xf32>
    %c72 = arith.constant 72 : index
    %c0_7 = arith.constant 0 : index
    %6 = vector.load %arg1[%c72, %c0_7] : memref<144x256xf32, #tpu.memory_space<vmem>>, vector<32x256xf32>
    %c104 = arith.constant 104 : index
    %c0_8 = arith.constant 0 : index
    %7 = vector.load %arg1[%c104, %c0_8] : memref<144x256xf32, #tpu.memory_space<vmem>>, vector<32x128xf32>
    %c136 = arith.constant 136 : index
    %c0_9 = arith.constant 0 : index
    %8 = vector.load %arg1[%c136, %c0_9] : memref<144x256xf32, #tpu.memory_space<vmem>>, vector<1x128xf32>
    %c0_10 = arith.constant 0 : index
    %c0_11 = arith.constant 0 : index
    %9 = vector.load %arg0[%c0_10, %c0_11] : memref<8x24xf32, #tpu.memory_space<vmem>>, vector<8x24xf32>
    %cst = arith.constant dense<0.000000e+00> : vector<8x32xf32>
    %10 = tpu.matmul %9, %0, %cst {dimension_numbers = #tpu.dot_dimension_numbers<[1], [0], [0], [1], [0, 0, 1, 1], [], []>} : vector<8x24xf32>, vector<24x32xf32>, vector<8x32xf32> -> vector<8x32xf32>
    %11 = vector.broadcast %1 : vector<1x32xf32> to vector<8x32xf32>
    %12 = arith.addf %10, %11 : vector<8x32xf32>
    %cst_12 = arith.constant 0.000000e+00 : f32
    %13 = vector.broadcast %cst_12 : f32 to vector<8x32xf32>
    %14 = arith.maximumf %12, %13 : vector<8x32xf32>
    %cst_13 = arith.constant dense<0.000000e+00> : vector<8x128xf32>
    %15 = tpu.matmul %14, %2, %cst_13 {dimension_numbers = #tpu.dot_dimension_numbers<[1], [0], [0], [1], [0, 0, 1, 1], [], []>} : vector<8x32xf32>, vector<32x128xf32>, vector<8x128xf32> -> vector<8x128xf32>
    %16 = vector.broadcast %4 : vector<1x128xf32> to vector<8x128xf32>
    %17 = arith.addf %15, %16 : vector<8x128xf32>
    %18 = vector.extract_strided_slice %17 {offsets = [0, 0], sizes = [1, 128], strides = [1, 1]} : vector<8x128xf32> to vector<1x128xf32>
    %19 = math.tanh %18 : vector<1x128xf32>
    %cst_14 = arith.constant 5.000000e-01 : f32
    %20 = vector.broadcast %cst_14 : f32 to vector<1x128xf32>
    %21 = arith.mulf %20, %19 : vector<1x128xf32>
    %cst_15 = arith.constant 5.000000e-01 : f32
    %22 = vector.broadcast %cst_15 : f32 to vector<1x128xf32>
    %23 = arith.addf %21, %22 : vector<1x128xf32>
    %24 = vector.extract_strided_slice %23 {offsets = [0, 0], sizes = [1, 32], strides = [1, 1]} : vector<1x128xf32> to vector<1x32xf32>
    %25 = vector.extract_strided_slice %19 {offsets = [0, 64], sizes = [1, 32], strides = [1, 1]} : vector<1x128xf32> to vector<1x32xf32>
    %26 = arith.mulf %24, %25 : vector<1x32xf32>
    %27 = vector.extract_strided_slice %23 {offsets = [0, 96], sizes = [1, 32], strides = [1, 1]} : vector<1x128xf32> to vector<1x32xf32>
    %28 = math.tanh %26 : vector<1x32xf32>
    %29 = arith.mulf %27, %28 : vector<1x32xf32>
    %cst_16 = arith.constant dense<0.000000e+00> : vector<1x256xf32>
    %30 = tpu.matmul %29, %6, %cst_16 {dimension_numbers = #tpu.dot_dimension_numbers<[1], [0], [0], [1], [0, 0, 1, 1], [], []>} : vector<1x32xf32>, vector<32x256xf32>, vector<1x256xf32> -> vector<1x256xf32>
    %31 = vector.extract_strided_slice %30 {offsets = [0, 0], sizes = [1, 128], strides = [1, 1]} : vector<1x256xf32> to vector<1x128xf32>
    %32 = arith.addf %31, %5 : vector<1x128xf32>
    %33 = math.tanh %32 : vector<1x128xf32>
    %cst_17 = arith.constant 5.000000e-01 : f32
    %34 = vector.broadcast %cst_17 : f32 to vector<1x128xf32>
    %35 = arith.mulf %34, %33 : vector<1x128xf32>
    %cst_18 = arith.constant 5.000000e-01 : f32
    %36 = vector.broadcast %cst_18 : f32 to vector<1x128xf32>
    %37 = arith.addf %35, %36 : vector<1x128xf32>
    %38 = vector.extract_strided_slice %37 {offsets = [0, 0], sizes = [1, 32], strides = [1, 1]} : vector<1x128xf32> to vector<1x32xf32>
    %39 = vector.extract_strided_slice %33 {offsets = [0, 64], sizes = [1, 32], strides = [1, 1]} : vector<1x128xf32> to vector<1x32xf32>
    %40 = arith.mulf %38, %39 : vector<1x32xf32>
    %41 = vector.extract_strided_slice %37 {offsets = [0, 96], sizes = [1, 32], strides = [1, 1]} : vector<1x128xf32> to vector<1x32xf32>
    %42 = math.tanh %40 : vector<1x32xf32>
    %43 = arith.mulf %41, %42 : vector<1x32xf32>
    %44 = vector.extract_strided_slice %30 {offsets = [0, 128], sizes = [1, 128], strides = [1, 1]} : vector<1x256xf32> to vector<1x128xf32>
    %cst_19 = arith.constant dense<0.000000e+00> : vector<1x128xf32>
    %45 = tpu.matmul %43, %3, %cst_19 {dimension_numbers = #tpu.dot_dimension_numbers<[1], [0], [0], [1], [0, 0, 1, 1], [], []>} : vector<1x32xf32>, vector<32x128xf32>, vector<1x128xf32> -> vector<1x128xf32>
    %46 = arith.addf %45, %5 : vector<1x128xf32>
    %47 = vector.extract_strided_slice %17 {offsets = [1, 0], sizes = [1, 128], strides = [1, 1]} : vector<8x128xf32> to vector<1x128xf32>
    %48 = arith.addf %47, %44 : vector<1x128xf32>
    %49 = math.tanh %48 : vector<1x128xf32>
    %cst_20 = arith.constant 5.000000e-01 : f32
    %50 = vector.broadcast %cst_20 : f32 to vector<1x128xf32>
    %51 = arith.mulf %50, %49 : vector<1x128xf32>
    %cst_21 = arith.constant 5.000000e-01 : f32
    %52 = vector.broadcast %cst_21 : f32 to vector<1x128xf32>
    %53 = arith.addf %51, %52 : vector<1x128xf32>
    %54 = vector.extract_strided_slice %53 {offsets = [0, 32], sizes = [1, 32], strides = [1, 1]} : vector<1x128xf32> to vector<1x32xf32>
    %55 = arith.mulf %54, %26 : vector<1x32xf32>
    %56 = vector.extract_strided_slice %53 {offsets = [0, 0], sizes = [1, 32], strides = [1, 1]} : vector<1x128xf32> to vector<1x32xf32>
    %57 = vector.extract_strided_slice %49 {offsets = [0, 64], sizes = [1, 32], strides = [1, 1]} : vector<1x128xf32> to vector<1x32xf32>
    %58 = arith.mulf %56, %57 : vector<1x32xf32>
    %59 = arith.addf %55, %58 : vector<1x32xf32>
    %60 = vector.extract_strided_slice %53 {offsets = [0, 96], sizes = [1, 32], strides = [1, 1]} : vector<1x128xf32> to vector<1x32xf32>
    %61 = math.tanh %59 : vector<1x32xf32>
    %62 = arith.mulf %60, %61 : vector<1x32xf32>
    %cst_22 = arith.constant dense<0.000000e+00> : vector<1x256xf32>
    %63 = tpu.matmul %62, %6, %cst_22 {dimension_numbers = #tpu.dot_dimension_numbers<[1], [0], [0], [1], [0, 0, 1, 1], [], []>} : vector<1x32xf32>, vector<32x256xf32>, vector<1x256xf32> -> vector<1x256xf32>
    %64 = vector.extract_strided_slice %63 {offsets = [0, 0], sizes = [1, 128], strides = [1, 1]} : vector<1x256xf32> to vector<1x128xf32>
    %65 = arith.addf %64, %46 : vector<1x128xf32>
    %66 = math.tanh %65 : vector<1x128xf32>
    %cst_23 = arith.constant 5.000000e-01 : f32
    %67 = vector.broadcast %cst_23 : f32 to vector<1x128xf32>
    %68 = arith.mulf %67, %66 : vector<1x128xf32>
    %cst_24 = arith.constant 5.000000e-01 : f32
    %69 = vector.broadcast %cst_24 : f32 to vector<1x128xf32>
    %70 = arith.addf %68, %69 : vector<1x128xf32>
    %71 = vector.extract_strided_slice %70 {offsets = [0, 32], sizes = [1, 32], strides = [1, 1]} : vector<1x128xf32> to vector<1x32xf32>
    %72 = arith.mulf %71, %40 : vector<1x32xf32>
    %73 = vector.extract_strided_slice %70 {offsets = [0, 0], sizes = [1, 32], strides = [1, 1]} : vector<1x128xf32> to vector<1x32xf32>
    %74 = vector.extract_strided_slice %66 {offsets = [0, 64], sizes = [1, 32], strides = [1, 1]} : vector<1x128xf32> to vector<1x32xf32>
    %75 = arith.mulf %73, %74 : vector<1x32xf32>
    %76 = arith.addf %72, %75 : vector<1x32xf32>
    %77 = vector.extract_strided_slice %70 {offsets = [0, 96], sizes = [1, 32], strides = [1, 1]} : vector<1x128xf32> to vector<1x32xf32>
    %78 = math.tanh %76 : vector<1x32xf32>
    %79 = arith.mulf %77, %78 : vector<1x32xf32>
    %80 = vector.extract_strided_slice %63 {offsets = [0, 128], sizes = [1, 128], strides = [1, 1]} : vector<1x256xf32> to vector<1x128xf32>
    %cst_25 = arith.constant dense<0.000000e+00> : vector<1x128xf32>
    %81 = tpu.matmul %79, %3, %cst_25 {dimension_numbers = #tpu.dot_dimension_numbers<[1], [0], [0], [1], [0, 0, 1, 1], [], []>} : vector<1x32xf32>, vector<32x128xf32>, vector<1x128xf32> -> vector<1x128xf32>
    %82 = arith.addf %81, %5 : vector<1x128xf32>
    %83 = vector.extract_strided_slice %17 {offsets = [2, 0], sizes = [1, 128], strides = [1, 1]} : vector<8x128xf32> to vector<1x128xf32>
    %84 = arith.addf %83, %80 : vector<1x128xf32>
    %85 = math.tanh %84 : vector<1x128xf32>
    %cst_26 = arith.constant 5.000000e-01 : f32
    %86 = vector.broadcast %cst_26 : f32 to vector<1x128xf32>
    %87 = arith.mulf %86, %85 : vector<1x128xf32>
    %cst_27 = arith.constant 5.000000e-01 : f32
    %88 = vector.broadcast %cst_27 : f32 to vector<1x128xf32>
    %89 = arith.addf %87, %88 : vector<1x128xf32>
    %90 = vector.extract_strided_slice %89 {offsets = [0, 32], sizes = [1, 32], strides = [1, 1]} : vector<1x128xf32> to vector<1x32xf32>
    %91 = arith.mulf %90, %59 : vector<1x32xf32>
    %92 = vector.extract_strided_slice %89 {offsets = [0, 0], sizes = [1, 32], strides = [1, 1]} : vector<1x128xf32> to vector<1x32xf32>
    %93 = vector.extract_strided_slice %85 {offsets = [0, 64], sizes = [1, 32], strides = [1, 1]} : vector<1x128xf32> to vector<1x32xf32>
    %94 = arith.mulf %92, %93 : vector<1x32xf32>
    %95 = arith.addf %91, %94 : vector<1x32xf32>
    %96 = vector.extract_strided_slice %89 {offsets = [0, 96], sizes = [1, 32], strides = [1, 1]} : vector<1x128xf32> to vector<1x32xf32>
    %97 = math.tanh %95 : vector<1x32xf32>
    %98 = arith.mulf %96, %97 : vector<1x32xf32>
    %cst_28 = arith.constant dense<0.000000e+00> : vector<1x256xf32>
    %99 = tpu.matmul %98, %6, %cst_28 {dimension_numbers = #tpu.dot_dimension_numbers<[1], [0], [0], [1], [0, 0, 1, 1], [], []>} : vector<1x32xf32>, vector<32x256xf32>, vector<1x256xf32> -> vector<1x256xf32>
    %100 = vector.extract_strided_slice %99 {offsets = [0, 0], sizes = [1, 128], strides = [1, 1]} : vector<1x256xf32> to vector<1x128xf32>
    %101 = arith.addf %100, %82 : vector<1x128xf32>
    %102 = math.tanh %101 : vector<1x128xf32>
    %cst_29 = arith.constant 5.000000e-01 : f32
    %103 = vector.broadcast %cst_29 : f32 to vector<1x128xf32>
    %104 = arith.mulf %103, %102 : vector<1x128xf32>
    %cst_30 = arith.constant 5.000000e-01 : f32
    %105 = vector.broadcast %cst_30 : f32 to vector<1x128xf32>
    %106 = arith.addf %104, %105 : vector<1x128xf32>
    %107 = vector.extract_strided_slice %106 {offsets = [0, 32], sizes = [1, 32], strides = [1, 1]} : vector<1x128xf32> to vector<1x32xf32>
    %108 = arith.mulf %107, %76 : vector<1x32xf32>
    %109 = vector.extract_strided_slice %106 {offsets = [0, 0], sizes = [1, 32], strides = [1, 1]} : vector<1x128xf32> to vector<1x32xf32>
    %110 = vector.extract_strided_slice %102 {offsets = [0, 64], sizes = [1, 32], strides = [1, 1]} : vector<1x128xf32> to vector<1x32xf32>
    %111 = arith.mulf %109, %110 : vector<1x32xf32>
    %112 = arith.addf %108, %111 : vector<1x32xf32>
    %113 = vector.extract_strided_slice %106 {offsets = [0, 96], sizes = [1, 32], strides = [1, 1]} : vector<1x128xf32> to vector<1x32xf32>
    %114 = math.tanh %112 : vector<1x32xf32>
    %115 = arith.mulf %113, %114 : vector<1x32xf32>
    %116 = vector.extract_strided_slice %99 {offsets = [0, 128], sizes = [1, 128], strides = [1, 1]} : vector<1x256xf32> to vector<1x128xf32>
    %cst_31 = arith.constant dense<0.000000e+00> : vector<1x128xf32>
    %117 = tpu.matmul %115, %3, %cst_31 {dimension_numbers = #tpu.dot_dimension_numbers<[1], [0], [0], [1], [0, 0, 1, 1], [], []>} : vector<1x32xf32>, vector<32x128xf32>, vector<1x128xf32> -> vector<1x128xf32>
    %118 = arith.addf %117, %5 : vector<1x128xf32>
    %119 = vector.extract_strided_slice %17 {offsets = [3, 0], sizes = [1, 128], strides = [1, 1]} : vector<8x128xf32> to vector<1x128xf32>
    %120 = arith.addf %119, %116 : vector<1x128xf32>
    %121 = math.tanh %120 : vector<1x128xf32>
    %cst_32 = arith.constant 5.000000e-01 : f32
    %122 = vector.broadcast %cst_32 : f32 to vector<1x128xf32>
    %123 = arith.mulf %122, %121 : vector<1x128xf32>
    %cst_33 = arith.constant 5.000000e-01 : f32
    %124 = vector.broadcast %cst_33 : f32 to vector<1x128xf32>
    %125 = arith.addf %123, %124 : vector<1x128xf32>
    %126 = vector.extract_strided_slice %125 {offsets = [0, 32], sizes = [1, 32], strides = [1, 1]} : vector<1x128xf32> to vector<1x32xf32>
    %127 = arith.mulf %126, %95 : vector<1x32xf32>
    %128 = vector.extract_strided_slice %125 {offsets = [0, 0], sizes = [1, 32], strides = [1, 1]} : vector<1x128xf32> to vector<1x32xf32>
    %129 = vector.extract_strided_slice %121 {offsets = [0, 64], sizes = [1, 32], strides = [1, 1]} : vector<1x128xf32> to vector<1x32xf32>
    %130 = arith.mulf %128, %129 : vector<1x32xf32>
    %131 = arith.addf %127, %130 : vector<1x32xf32>
    %132 = vector.extract_strided_slice %125 {offsets = [0, 96], sizes = [1, 32], strides = [1, 1]} : vector<1x128xf32> to vector<1x32xf32>
    %133 = math.tanh %131 : vector<1x32xf32>
    %134 = arith.mulf %132, %133 : vector<1x32xf32>
    %cst_34 = arith.constant dense<0.000000e+00> : vector<1x256xf32>
    %135 = tpu.matmul %134, %6, %cst_34 {dimension_numbers = #tpu.dot_dimension_numbers<[1], [0], [0], [1], [0, 0, 1, 1], [], []>} : vector<1x32xf32>, vector<32x256xf32>, vector<1x256xf32> -> vector<1x256xf32>
    %136 = vector.extract_strided_slice %135 {offsets = [0, 0], sizes = [1, 128], strides = [1, 1]} : vector<1x256xf32> to vector<1x128xf32>
    %137 = arith.addf %136, %118 : vector<1x128xf32>
    %138 = math.tanh %137 : vector<1x128xf32>
    %cst_35 = arith.constant 5.000000e-01 : f32
    %139 = vector.broadcast %cst_35 : f32 to vector<1x128xf32>
    %140 = arith.mulf %139, %138 : vector<1x128xf32>
    %cst_36 = arith.constant 5.000000e-01 : f32
    %141 = vector.broadcast %cst_36 : f32 to vector<1x128xf32>
    %142 = arith.addf %140, %141 : vector<1x128xf32>
    %143 = vector.extract_strided_slice %142 {offsets = [0, 32], sizes = [1, 32], strides = [1, 1]} : vector<1x128xf32> to vector<1x32xf32>
    %144 = arith.mulf %143, %112 : vector<1x32xf32>
    %145 = vector.extract_strided_slice %142 {offsets = [0, 0], sizes = [1, 32], strides = [1, 1]} : vector<1x128xf32> to vector<1x32xf32>
    %146 = vector.extract_strided_slice %138 {offsets = [0, 64], sizes = [1, 32], strides = [1, 1]} : vector<1x128xf32> to vector<1x32xf32>
    %147 = arith.mulf %145, %146 : vector<1x32xf32>
    %148 = arith.addf %144, %147 : vector<1x32xf32>
    %149 = vector.extract_strided_slice %142 {offsets = [0, 96], sizes = [1, 32], strides = [1, 1]} : vector<1x128xf32> to vector<1x32xf32>
    %150 = math.tanh %148 : vector<1x32xf32>
    %151 = arith.mulf %149, %150 : vector<1x32xf32>
    %152 = vector.extract_strided_slice %135 {offsets = [0, 128], sizes = [1, 128], strides = [1, 1]} : vector<1x256xf32> to vector<1x128xf32>
    %cst_37 = arith.constant dense<0.000000e+00> : vector<1x128xf32>
    %153 = tpu.matmul %151, %3, %cst_37 {dimension_numbers = #tpu.dot_dimension_numbers<[1], [0], [0], [1], [0, 0, 1, 1], [], []>} : vector<1x32xf32>, vector<32x128xf32>, vector<1x128xf32> -> vector<1x128xf32>
    %154 = arith.addf %153, %5 : vector<1x128xf32>
    %155 = vector.extract_strided_slice %17 {offsets = [4, 0], sizes = [1, 128], strides = [1, 1]} : vector<8x128xf32> to vector<1x128xf32>
    %156 = arith.addf %155, %152 : vector<1x128xf32>
    %157 = math.tanh %156 : vector<1x128xf32>
    %cst_38 = arith.constant 5.000000e-01 : f32
    %158 = vector.broadcast %cst_38 : f32 to vector<1x128xf32>
    %159 = arith.mulf %158, %157 : vector<1x128xf32>
    %cst_39 = arith.constant 5.000000e-01 : f32
    %160 = vector.broadcast %cst_39 : f32 to vector<1x128xf32>
    %161 = arith.addf %159, %160 : vector<1x128xf32>
    %162 = vector.extract_strided_slice %161 {offsets = [0, 32], sizes = [1, 32], strides = [1, 1]} : vector<1x128xf32> to vector<1x32xf32>
    %163 = arith.mulf %162, %131 : vector<1x32xf32>
    %164 = vector.extract_strided_slice %161 {offsets = [0, 0], sizes = [1, 32], strides = [1, 1]} : vector<1x128xf32> to vector<1x32xf32>
    %165 = vector.extract_strided_slice %157 {offsets = [0, 64], sizes = [1, 32], strides = [1, 1]} : vector<1x128xf32> to vector<1x32xf32>
    %166 = arith.mulf %164, %165 : vector<1x32xf32>
    %167 = arith.addf %163, %166 : vector<1x32xf32>
    %168 = vector.extract_strided_slice %161 {offsets = [0, 96], sizes = [1, 32], strides = [1, 1]} : vector<1x128xf32> to vector<1x32xf32>
    %169 = math.tanh %167 : vector<1x32xf32>
    %170 = arith.mulf %168, %169 : vector<1x32xf32>
    %cst_40 = arith.constant dense<0.000000e+00> : vector<1x256xf32>
    %171 = tpu.matmul %170, %6, %cst_40 {dimension_numbers = #tpu.dot_dimension_numbers<[1], [0], [0], [1], [0, 0, 1, 1], [], []>} : vector<1x32xf32>, vector<32x256xf32>, vector<1x256xf32> -> vector<1x256xf32>
    %172 = vector.extract_strided_slice %171 {offsets = [0, 0], sizes = [1, 128], strides = [1, 1]} : vector<1x256xf32> to vector<1x128xf32>
    %173 = arith.addf %172, %154 : vector<1x128xf32>
    %174 = math.tanh %173 : vector<1x128xf32>
    %cst_41 = arith.constant 5.000000e-01 : f32
    %175 = vector.broadcast %cst_41 : f32 to vector<1x128xf32>
    %176 = arith.mulf %175, %174 : vector<1x128xf32>
    %cst_42 = arith.constant 5.000000e-01 : f32
    %177 = vector.broadcast %cst_42 : f32 to vector<1x128xf32>
    %178 = arith.addf %176, %177 : vector<1x128xf32>
    %179 = vector.extract_strided_slice %178 {offsets = [0, 32], sizes = [1, 32], strides = [1, 1]} : vector<1x128xf32> to vector<1x32xf32>
    %180 = arith.mulf %179, %148 : vector<1x32xf32>
    %181 = vector.extract_strided_slice %178 {offsets = [0, 0], sizes = [1, 32], strides = [1, 1]} : vector<1x128xf32> to vector<1x32xf32>
    %182 = vector.extract_strided_slice %174 {offsets = [0, 64], sizes = [1, 32], strides = [1, 1]} : vector<1x128xf32> to vector<1x32xf32>
    %183 = arith.mulf %181, %182 : vector<1x32xf32>
    %184 = arith.addf %180, %183 : vector<1x32xf32>
    %185 = vector.extract_strided_slice %178 {offsets = [0, 96], sizes = [1, 32], strides = [1, 1]} : vector<1x128xf32> to vector<1x32xf32>
    %186 = math.tanh %184 : vector<1x32xf32>
    %187 = arith.mulf %185, %186 : vector<1x32xf32>
    %188 = vector.extract_strided_slice %171 {offsets = [0, 128], sizes = [1, 128], strides = [1, 1]} : vector<1x256xf32> to vector<1x128xf32>
    %cst_43 = arith.constant dense<0.000000e+00> : vector<1x128xf32>
    %189 = tpu.matmul %187, %3, %cst_43 {dimension_numbers = #tpu.dot_dimension_numbers<[1], [0], [0], [1], [0, 0, 1, 1], [], []>} : vector<1x32xf32>, vector<32x128xf32>, vector<1x128xf32> -> vector<1x128xf32>
    %190 = arith.addf %189, %5 : vector<1x128xf32>
    %191 = vector.extract_strided_slice %17 {offsets = [5, 0], sizes = [1, 128], strides = [1, 1]} : vector<8x128xf32> to vector<1x128xf32>
    %192 = arith.addf %191, %188 : vector<1x128xf32>
    %193 = math.tanh %192 : vector<1x128xf32>
    %cst_44 = arith.constant 5.000000e-01 : f32
    %194 = vector.broadcast %cst_44 : f32 to vector<1x128xf32>
    %195 = arith.mulf %194, %193 : vector<1x128xf32>
    %cst_45 = arith.constant 5.000000e-01 : f32
    %196 = vector.broadcast %cst_45 : f32 to vector<1x128xf32>
    %197 = arith.addf %195, %196 : vector<1x128xf32>
    %198 = vector.extract_strided_slice %197 {offsets = [0, 32], sizes = [1, 32], strides = [1, 1]} : vector<1x128xf32> to vector<1x32xf32>
    %199 = arith.mulf %198, %167 : vector<1x32xf32>
    %200 = vector.extract_strided_slice %197 {offsets = [0, 0], sizes = [1, 32], strides = [1, 1]} : vector<1x128xf32> to vector<1x32xf32>
    %201 = vector.extract_strided_slice %193 {offsets = [0, 64], sizes = [1, 32], strides = [1, 1]} : vector<1x128xf32> to vector<1x32xf32>
    %202 = arith.mulf %200, %201 : vector<1x32xf32>
    %203 = arith.addf %199, %202 : vector<1x32xf32>
    %204 = vector.extract_strided_slice %197 {offsets = [0, 96], sizes = [1, 32], strides = [1, 1]} : vector<1x128xf32> to vector<1x32xf32>
    %205 = math.tanh %203 : vector<1x32xf32>
    %206 = arith.mulf %204, %205 : vector<1x32xf32>
    %cst_46 = arith.constant dense<0.000000e+00> : vector<1x256xf32>
    %207 = tpu.matmul %206, %6, %cst_46 {dimension_numbers = #tpu.dot_dimension_numbers<[1], [0], [0], [1], [0, 0, 1, 1], [], []>} : vector<1x32xf32>, vector<32x256xf32>, vector<1x256xf32> -> vector<1x256xf32>
    %208 = vector.extract_strided_slice %207 {offsets = [0, 0], sizes = [1, 128], strides = [1, 1]} : vector<1x256xf32> to vector<1x128xf32>
    %209 = arith.addf %208, %190 : vector<1x128xf32>
    %210 = math.tanh %209 : vector<1x128xf32>
    %cst_47 = arith.constant 5.000000e-01 : f32
    %211 = vector.broadcast %cst_47 : f32 to vector<1x128xf32>
    %212 = arith.mulf %211, %210 : vector<1x128xf32>
    %cst_48 = arith.constant 5.000000e-01 : f32
    %213 = vector.broadcast %cst_48 : f32 to vector<1x128xf32>
    %214 = arith.addf %212, %213 : vector<1x128xf32>
    %215 = vector.extract_strided_slice %214 {offsets = [0, 32], sizes = [1, 32], strides = [1, 1]} : vector<1x128xf32> to vector<1x32xf32>
    %216 = arith.mulf %215, %184 : vector<1x32xf32>
    %217 = vector.extract_strided_slice %214 {offsets = [0, 0], sizes = [1, 32], strides = [1, 1]} : vector<1x128xf32> to vector<1x32xf32>
    %218 = vector.extract_strided_slice %210 {offsets = [0, 64], sizes = [1, 32], strides = [1, 1]} : vector<1x128xf32> to vector<1x32xf32>
    %219 = arith.mulf %217, %218 : vector<1x32xf32>
    %220 = arith.addf %216, %219 : vector<1x32xf32>
    %221 = vector.extract_strided_slice %214 {offsets = [0, 96], sizes = [1, 32], strides = [1, 1]} : vector<1x128xf32> to vector<1x32xf32>
    %222 = math.tanh %220 : vector<1x32xf32>
    %223 = arith.mulf %221, %222 : vector<1x32xf32>
    %224 = vector.extract_strided_slice %207 {offsets = [0, 128], sizes = [1, 128], strides = [1, 1]} : vector<1x256xf32> to vector<1x128xf32>
    %cst_49 = arith.constant dense<0.000000e+00> : vector<1x128xf32>
    %225 = tpu.matmul %223, %3, %cst_49 {dimension_numbers = #tpu.dot_dimension_numbers<[1], [0], [0], [1], [0, 0, 1, 1], [], []>} : vector<1x32xf32>, vector<32x128xf32>, vector<1x128xf32> -> vector<1x128xf32>
    %226 = arith.addf %225, %5 : vector<1x128xf32>
    %227 = vector.extract_strided_slice %17 {offsets = [6, 0], sizes = [1, 128], strides = [1, 1]} : vector<8x128xf32> to vector<1x128xf32>
    %228 = arith.addf %227, %224 : vector<1x128xf32>
    %229 = math.tanh %228 : vector<1x128xf32>
    %cst_50 = arith.constant 5.000000e-01 : f32
    %230 = vector.broadcast %cst_50 : f32 to vector<1x128xf32>
    %231 = arith.mulf %230, %229 : vector<1x128xf32>
    %cst_51 = arith.constant 5.000000e-01 : f32
    %232 = vector.broadcast %cst_51 : f32 to vector<1x128xf32>
    %233 = arith.addf %231, %232 : vector<1x128xf32>
    %234 = vector.extract_strided_slice %233 {offsets = [0, 32], sizes = [1, 32], strides = [1, 1]} : vector<1x128xf32> to vector<1x32xf32>
    %235 = arith.mulf %234, %203 : vector<1x32xf32>
    %236 = vector.extract_strided_slice %233 {offsets = [0, 0], sizes = [1, 32], strides = [1, 1]} : vector<1x128xf32> to vector<1x32xf32>
    %237 = vector.extract_strided_slice %229 {offsets = [0, 64], sizes = [1, 32], strides = [1, 1]} : vector<1x128xf32> to vector<1x32xf32>
    %238 = arith.mulf %236, %237 : vector<1x32xf32>
    %239 = arith.addf %235, %238 : vector<1x32xf32>
    %240 = vector.extract_strided_slice %233 {offsets = [0, 96], sizes = [1, 32], strides = [1, 1]} : vector<1x128xf32> to vector<1x32xf32>
    %241 = math.tanh %239 : vector<1x32xf32>
    %242 = arith.mulf %240, %241 : vector<1x32xf32>
    %cst_52 = arith.constant dense<0.000000e+00> : vector<1x256xf32>
    %243 = tpu.matmul %242, %6, %cst_52 {dimension_numbers = #tpu.dot_dimension_numbers<[1], [0], [0], [1], [0, 0, 1, 1], [], []>} : vector<1x32xf32>, vector<32x256xf32>, vector<1x256xf32> -> vector<1x256xf32>
    %244 = vector.extract_strided_slice %243 {offsets = [0, 0], sizes = [1, 128], strides = [1, 1]} : vector<1x256xf32> to vector<1x128xf32>
    %245 = arith.addf %244, %226 : vector<1x128xf32>
    %246 = math.tanh %245 : vector<1x128xf32>
    %cst_53 = arith.constant 5.000000e-01 : f32
    %247 = vector.broadcast %cst_53 : f32 to vector<1x128xf32>
    %248 = arith.mulf %247, %246 : vector<1x128xf32>
    %cst_54 = arith.constant 5.000000e-01 : f32
    %249 = vector.broadcast %cst_54 : f32 to vector<1x128xf32>
    %250 = arith.addf %248, %249 : vector<1x128xf32>
    %251 = vector.extract_strided_slice %250 {offsets = [0, 32], sizes = [1, 32], strides = [1, 1]} : vector<1x128xf32> to vector<1x32xf32>
    %252 = arith.mulf %251, %220 : vector<1x32xf32>
    %253 = vector.extract_strided_slice %250 {offsets = [0, 0], sizes = [1, 32], strides = [1, 1]} : vector<1x128xf32> to vector<1x32xf32>
    %254 = vector.extract_strided_slice %246 {offsets = [0, 64], sizes = [1, 32], strides = [1, 1]} : vector<1x128xf32> to vector<1x32xf32>
    %255 = arith.mulf %253, %254 : vector<1x32xf32>
    %256 = arith.addf %252, %255 : vector<1x32xf32>
    %257 = vector.extract_strided_slice %250 {offsets = [0, 96], sizes = [1, 32], strides = [1, 1]} : vector<1x128xf32> to vector<1x32xf32>
    %258 = math.tanh %256 : vector<1x32xf32>
    %259 = arith.mulf %257, %258 : vector<1x32xf32>
    %260 = vector.extract_strided_slice %243 {offsets = [0, 128], sizes = [1, 128], strides = [1, 1]} : vector<1x256xf32> to vector<1x128xf32>
    %cst_55 = arith.constant dense<0.000000e+00> : vector<1x128xf32>
    %261 = tpu.matmul %259, %3, %cst_55 {dimension_numbers = #tpu.dot_dimension_numbers<[1], [0], [0], [1], [0, 0, 1, 1], [], []>} : vector<1x32xf32>, vector<32x128xf32>, vector<1x128xf32> -> vector<1x128xf32>
    %262 = arith.addf %261, %5 : vector<1x128xf32>
    %263 = vector.extract_strided_slice %17 {offsets = [7, 0], sizes = [1, 128], strides = [1, 1]} : vector<8x128xf32> to vector<1x128xf32>
    %264 = arith.addf %263, %260 : vector<1x128xf32>
    %265 = math.tanh %264 : vector<1x128xf32>
    %cst_56 = arith.constant 5.000000e-01 : f32
    %266 = vector.broadcast %cst_56 : f32 to vector<1x128xf32>
    %267 = arith.mulf %266, %265 : vector<1x128xf32>
    %cst_57 = arith.constant 5.000000e-01 : f32
    %268 = vector.broadcast %cst_57 : f32 to vector<1x128xf32>
    %269 = arith.addf %267, %268 : vector<1x128xf32>
    %270 = vector.extract_strided_slice %269 {offsets = [0, 32], sizes = [1, 32], strides = [1, 1]} : vector<1x128xf32> to vector<1x32xf32>
    %271 = arith.mulf %270, %239 : vector<1x32xf32>
    %272 = vector.extract_strided_slice %269 {offsets = [0, 0], sizes = [1, 32], strides = [1, 1]} : vector<1x128xf32> to vector<1x32xf32>
    %273 = vector.extract_strided_slice %265 {offsets = [0, 64], sizes = [1, 32], strides = [1, 1]} : vector<1x128xf32> to vector<1x32xf32>
    %274 = arith.mulf %272, %273 : vector<1x32xf32>
    %275 = arith.addf %271, %274 : vector<1x32xf32>
    %276 = vector.extract_strided_slice %269 {offsets = [0, 96], sizes = [1, 32], strides = [1, 1]} : vector<1x128xf32> to vector<1x32xf32>
    %277 = math.tanh %275 : vector<1x32xf32>
    %278 = arith.mulf %276, %277 : vector<1x32xf32>
    %cst_58 = arith.constant dense<0.000000e+00> : vector<1x256xf32>
    %279 = tpu.matmul %278, %6, %cst_58 {dimension_numbers = #tpu.dot_dimension_numbers<[1], [0], [0], [1], [0, 0, 1, 1], [], []>} : vector<1x32xf32>, vector<32x256xf32>, vector<1x256xf32> -> vector<1x256xf32>
    %280 = vector.extract_strided_slice %279 {offsets = [0, 0], sizes = [1, 128], strides = [1, 1]} : vector<1x256xf32> to vector<1x128xf32>
    %281 = arith.addf %280, %262 : vector<1x128xf32>
    %282 = math.tanh %281 : vector<1x128xf32>
    %cst_59 = arith.constant 5.000000e-01 : f32
    %283 = vector.broadcast %cst_59 : f32 to vector<1x128xf32>
    %284 = arith.mulf %283, %282 : vector<1x128xf32>
    %cst_60 = arith.constant 5.000000e-01 : f32
    %285 = vector.broadcast %cst_60 : f32 to vector<1x128xf32>
    %286 = arith.addf %284, %285 : vector<1x128xf32>
    %287 = vector.extract_strided_slice %286 {offsets = [0, 32], sizes = [1, 32], strides = [1, 1]} : vector<1x128xf32> to vector<1x32xf32>
    %288 = arith.mulf %287, %256 : vector<1x32xf32>
    %289 = vector.extract_strided_slice %286 {offsets = [0, 0], sizes = [1, 32], strides = [1, 1]} : vector<1x128xf32> to vector<1x32xf32>
    %290 = vector.extract_strided_slice %282 {offsets = [0, 64], sizes = [1, 32], strides = [1, 1]} : vector<1x128xf32> to vector<1x32xf32>
    %291 = arith.mulf %289, %290 : vector<1x32xf32>
    %292 = arith.addf %288, %291 : vector<1x32xf32>
    %293 = vector.extract_strided_slice %286 {offsets = [0, 96], sizes = [1, 32], strides = [1, 1]} : vector<1x128xf32> to vector<1x32xf32>
    %294 = math.tanh %292 : vector<1x32xf32>
    %295 = arith.mulf %293, %294 : vector<1x32xf32>
    %296 = tpu.concatenate %43, %79, %115, %151, %187, %223, %259, %295 in 0 : vector<1x32xf32>, vector<1x32xf32>, vector<1x32xf32>, vector<1x32xf32>, vector<1x32xf32>, vector<1x32xf32>, vector<1x32xf32>, vector<1x32xf32> -> vector<8x32xf32>
    %cst_61 = arith.constant dense<0.000000e+00> : vector<8x128xf32>
    %297 = tpu.matmul %296, %7, %cst_61 {dimension_numbers = #tpu.dot_dimension_numbers<[1], [0], [0], [1], [0, 0, 1, 1], [], []>} : vector<8x32xf32>, vector<32x128xf32>, vector<8x128xf32> -> vector<8x128xf32>
    %298 = vector.broadcast %8 : vector<1x128xf32> to vector<8x128xf32>
    %299 = arith.addf %297, %298 : vector<8x128xf32>
    %c0_62 = arith.constant 0 : index
    %c0_63 = arith.constant 0 : index
    %300 = vector.load %arg2[%c0_62, %c0_63] : memref<8x128xf32, #tpu.memory_space<vmem>>, vector<8x128xf32>
    tpu.vector_store %arg2[%c0_62, %c0_63], %299 {strides = array<i32>} : memref<8x128xf32, #tpu.memory_space<vmem>>, vector<8x128xf32>,
    return
  }
}

</mosaic_0001>

<llo_original>
// kernel: tpu_custom_call.1
$region0: #{tpu_custom_call.1}
  #allocation0 [shape = 'u32[]', space=smem, size = 0x4, offset = 0x4, fixed_abs, tag = 'smem constant byte address 0x4 - core index']
  #allocation1 [shape = 'u32[144,128]{1,0:T(1,128)}', space=vmem, size = 0x12000, scoped, tag = 'internal scratch']
  %s0 = inlined_call_operand.hbm [shape: f32[8,24], index: 0, kind: input, shape index: {}]
  %s1 = inlined_call_operand.hbm [shape: f32[144,256], index: 1, kind: input, shape index: {}]
  %s2 = inlined_call_operand.hbm [shape: f32[8,128], index: 2, kind: output, shape index: {}]
  %s3 = sld [smem:[#allocation0]]
  $region26: #{tpu_custom_call.1} parent=0
    _
  %s5 = ssub.s32 1, %s3
  %s6 = scalar_select 0, %s5, %s3
  $region1: #{tpu_custom_call.1} parent=0
    #allocation2 [shape = 'u8[4096]{0}', space=vmem, size = 0x1000, scoped, tag = 'input window, operand 0, single buffered']
    #allocation3 [shape = 's32[1]{0}', space=sflag, size = 0x4, scoped, tag = 'scoped memory for tpu_custom_call.1']
    #allocation4 [shape = 's32[1]{0}', space=sflag, size = 0x4, scoped, tag = 'scoped memory for tpu_custom_call.1']
    #allocation5 [shape = 'u8[147456]{0}', space=vmem, size = 0x24000, scoped, tag = 'input window, operand 1, single buffered']
    #allocation6 [shape = 's32[1]{0}', space=sflag, size = 0x4, scoped, tag = 'scoped memory for tpu_custom_call.1']
    #allocation7 [shape = 'u8[4096]{0}', space=vmem, size = 0x1000, scoped, tag = 'output window, operand 0, single buffered']
    %7 = vsyncpa [#allocation3], 0
    %8 = vsyncpa [#allocation6], 0
    %9 = vsyncpa [#allocation4], 0
    // Predicated region
    $region2: #{tpu_custom_call.1} parent=1 // pred_check
      _
    $region3: #{tpu_custom_call.1} parent=1 // pred_check_branch
      %11 = sbr.rel (0) target = $region5
    $region4: #{tpu_custom_call.1} parent=1 // pred_region
      %s13 = ssub.s32 128, 128
      %14 = vsyncadd [#allocation3], %s13
      %s16 = sshll.u32 [#allocation2], 4
      %s17 = int_to_ptr.vmem [resolvable:$true] %s16
      %19 = dma.hbm_to_vmem [thread:$0]  %s0, 128, %s17, [#allocation3]
    $region5: #{tpu_custom_call.1} parent=1 // pred_fallthru
      _
    // Predicated region
    $region6: #{tpu_custom_call.1} parent=1 // pred_check
      _
    $region7: #{tpu_custom_call.1} parent=1 // pred_check_branch
      %21 = sbr.rel (0) target = $region9
    $region8: #{tpu_custom_call.1} parent=1 // pred_region
      %s23 = ssub.s32 4608, 4608
      %24 = vsyncadd [#allocation6], %s23
      %s25 = sshll.u32 [#allocation5], 4
      %s26 = int_to_ptr.vmem [resolvable:$true] %s25
      %31 = dma.hbm_to_vmem [thread:$0]  %s1, 4608, %s26, [#allocation6], 256, 256, 16
    $region9: #{tpu_custom_call.1} parent=1 // pred_fallthru
      _
    // Predicated region
    $region10: #{tpu_custom_call.1} parent=1 // pred_check
      _
    $region11: #{tpu_custom_call.1} parent=1 // pred_check_branch
      %33 = sbr.rel (0) target = $region13
    $region12: #{tpu_custom_call.1} parent=1 // pred_region
      %34 = dma.done [#allocation3], 128
    $region13: #{tpu_custom_call.1} parent=1 // pred_fallthru
      _
    // Predicated region
    $region14: #{tpu_custom_call.1} parent=1 // pred_check
      _
    $region15: #{tpu_custom_call.1} parent=1 // pred_check_branch
      %36 = sbr.rel (0) target = $region17
    $region16: #{tpu_custom_call.1} parent=1 // pred_region
      %37 = dma.done [#allocation6], 4608
    $region17: #{tpu_custom_call.1} parent=1 // pred_fallthru
      _
    %v38 = vld [vmem:[#allocation5] sm:$0xff]
    %v39 = vld [vmem:[#allocation5 + $0x10] sm:$0xff]
    %v40 = vld [vmem:[#allocation5 + $0x20] sm:$0xff]
    %v41 = vld [vmem:[#allocation5 + $0x30] ss:$0 sm:$0xff]
    %v42 = vld [vmem:[#allocation5 + $0x40] sm:$0xff]
    %v43 = vld [vmem:[#allocation5 + $0x50] sm:$0xff]
    %v44 = vld [vmem:[#allocation5 + $0x60] sm:$0xff]
    %v45 = vld [vmem:[#allocation5 + $0x70] sm:$0xff]
    %v46 = vld [vmem:[#allocation5 + $0x48] sm:$0xff]
    %v47 = vld [vmem:[#allocation5 + $0x58] sm:$0xff]
    %v48 = vld [vmem:[#allocation5 + $0x68] sm:$0xff]
    %v49 = vld [vmem:[#allocation5 + $0x78] sm:$0xff]
    %v50 = vld [vmem:[#allocation5 + $0x80] ss:$0 sm:$0xff]
    %v51 = vld [vmem:[#allocation5 + $0x88] ss:$0 sm:$0xff]
    %v52 = vld [vmem:[#allocation5 + $0x90] sm:$0xff]
    %v53 = vld [vmem:[#allocation5 + $0x98] sm:$0xff]
    %v54 = vld [vmem:[#allocation5 + $0xa0] sm:$0xff]
    %v55 = vld [vmem:[#allocation5 + $0xa8] sm:$0xff]
    %v56 = vld [vmem:[#allocation5 + $0xb0] sm:$0xff]
    %v57 = vld [vmem:[#allocation5 + $0xb8] sm:$0xff]
    %v58 = vld [vmem:[#allocation5 + $0xc0] sm:$0xff]
    %v59 = vld [vmem:[#allocation5 + $0xc8] sm:$0xff]
    %v60 = vld [vmem:[#allocation5 + $0xd0] sm:$0xff]
    %v61 = vld [vmem:[#allocation5 + $0xe0] sm:$0xff]
    %v62 = vld [vmem:[#allocation5 + $0xf0] sm:$0xff]
    %v63 = vld [vmem:[#allocation5 + $0x100] sm:$0xff]
    %v64 = vld [vmem:[#allocation5 + $0x110] ss:$0 sm:$0xff]
    %v65 = vld [vmem:[#allocation2] sm:$0xff]
    %vm66 = vcmask 195584
    %v68 = vsel %vm66, %v65, 0
    %70 = vmatprep.subr.mxu0 0.0
    %71 = vmatpush1.msra.mxu0 %v38
    %72 = vmatprep.subr.mxu0 0.0
    %73 = vmatpush1.msra.mxu0 %v39
    %74 = vmatprep.subr.mxu0 0.0
    %75 = vmatpush1.msra.mxu0 %v40
    %76 = vmatprep.subr.mxu0 0.0
    %77 = vmatpush1.msra.mxu0 0.0
    %78 = vmatprep.subr.mxu0 0.0
    %79 = vmatpush1.msra.mxu0 0.0
    %80 = vmatprep.subr.mxu0 0.0
    %81 = vmatpush1.msra.mxu0 0.0
    %82 = vmatprep.subr.mxu0 0.0
    %83 = vmatpush1.msra.mxu0 0.0
    %84 = vmatprep.subr.mxu0 0.0
    %85 = vmatpush1.msra.mxu0 0.0
    %86 = vmatprep.subr.mxu0 0.0
    %87 = vmatpush1.msra.mxu0 0.0
    %88 = vmatprep.subr.mxu0 0.0
    %89 = vmatpush1.msra.mxu0 0.0
    %90 = vmatprep.subr.mxu0 0.0
    %91 = vmatpush1.msra.mxu0 0.0
    %92 = vmatprep.subr.mxu0 0.0
    %93 = vmatpush1.msra.mxu0 0.0
    %94 = vmatprep.subr.mxu0 0.0
    %95 = vmatpush1.msra.mxu0 0.0
    %96 = vmatprep.subr.mxu0 0.0
    %97 = vmatpush1.msra.mxu0 0.0
    %98 = vmatprep.subr.mxu0 0.0
    %99 = vmatpush1.msra.mxu0 0.0
    %100 = vmatprep.subr.mxu0 0.0
    %101 = vmatpush1.msra.mxu0 0.0
    %102 = vmatprep.subr.mxu0 0.0
    %103 = vmatpush1.msra.mxu0 0.0
    %104 = vmatprep.subr.mxu0 0.0
    %105 = vmatpush1.msra.mxu0 0.0
    %106 = vmatprep.subr.mxu0 0.0
    %107 = vmatpush1.msra.mxu0 0.0
    %108 = vmatprep.subr.mxu0 0.0
    %109 = vmatpush1.msra.mxu0 0.0
    %110 = vmatprep.subr.mxu0 0.0
    %111 = vmatpush1.msra.mxu0 0.0
    %112 = vmatprep.subr.mxu0 0.0
    %113 = vmatpush1.msra.mxu0 0.0
    %114 = vmatprep.subr.mxu0 0.0
    %115 = vmatpush1.msra.mxu0 0.0
    %116 = vmatprep.subr.mxu0 0.0
    %117 = vmatpush1.msra.mxu0 0.0
    %118 = vmatprep.subr.mxu0 0.0
    %119 = vmatpush1.msra.mxu0 0.0
    %120 = vmatprep.subr.mxu0 0.0
    %121 = vmatpush1.msra.mxu0 0.0
    %122 = vmatprep.subr.mxu0 0.0
    %123 = vmatpush1.msra.mxu0 0.0
    %124 = vmatprep.subr.mxu0 0.0
    %125 = vmatpush1.msra.mxu0 0.0
    %126 = vmatprep.subr.mxu0 0.0
    %127 = vmatpush1.msra.mxu0 0.0
    %128 = vmatprep.subr.mxu0 0.0
    %129 = vmatpush1.msra.mxu0 0.0
    %130 = vmatprep.subr.mxu0 0.0
    %131 = vmatpush1.msra.mxu0 0.0
    %132 = vmatprep.subr.mxu0 0.0
    %133 = vmatpush1.msra.mxu0 0.0
    %134 = vmatprep.mubr.f32.mxu0 0.0
    %135 = vmatmul.mubr.f32.gmra.mrb[0].mxu0 %v68
    %v136 = vpop.f32.mrb[0].mxu0
    %v137 = vadd.f32 %v41, %v136
    %v138 = vpop.f32.mrb[0].mxu0
    %139 = vdwg.mxu0
    %v140 = vmax.f32 %v137, 0.0
    %vm141 = vcmask 261120
    %v143 = vsel %vm141, %v140, 0
    %145 = vmatprep.subr.mxu0 0.0
    %146 = vmatpush1.msra.mxu0 %v42
    %147 = vmatprep.subr.mxu0 0.0
    %148 = vmatpush1.msra.mxu0 %v43
    %149 = vmatprep.subr.mxu0 0.0
    %150 = vmatpush1.msra.mxu0 %v44
    %151 = vmatprep.subr.mxu0 0.0
    %152 = vmatpush1.msra.mxu0 %v45
    %153 = vmatprep.subr.mxu0 0.0
    %154 = vmatpush1.msra.mxu0 0.0
    %155 = vmatprep.subr.mxu0 0.0
    %156 = vmatpush1.msra.mxu0 0.0
    %157 = vmatprep.subr.mxu0 0.0
    %158 = vmatpush1.msra.mxu0 0.0
    %159 = vmatprep.subr.mxu0 0.0
    %160 = vmatpush1.msra.mxu0 0.0
    %161 = vmatprep.subr.mxu0 0.0
    %162 = vmatpush1.msra.mxu0 0.0
    %163 = vmatprep.subr.mxu0 0.0
    %164 = vmatpush1.msra.mxu0 0.0
    %165 = vmatprep.subr.mxu0 0.0
    %166 = vmatpush1.msra.mxu0 0.0
    %167 = vmatprep.subr.mxu0 0.0
    %168 = vmatpush1.msra.mxu0 0.0
    %169 = vmatprep.subr.mxu0 0.0
    %170 = vmatpush1.msra.mxu0 0.0
    %171 = vmatprep.subr.mxu0 0.0
    %172 = vmatpush1.msra.mxu0 0.0
    %173 = vmatprep.subr.mxu0 0.0
    %174 = vmatpush1.msra.mxu0 0.0
    %175 = vmatprep.subr.mxu0 0.0
    %176 = vmatpush1.msra.mxu0 0.0
    %177 = vmatprep.subr.mxu0 0.0
    %178 = vmatpush1.msra.mxu0 0.0
    %179 = vmatprep.subr.mxu0 0.0
    %180 = vmatpush1.msra.mxu0 0.0
    %181 = vmatprep.subr.mxu0 0.0
    %182 = vmatpush1.msra.mxu0 0.0
    %183 = vmatprep.subr.mxu0 0.0
    %184 = vmatpush1.msra.mxu0 0.0
    %185 = vmatprep.subr.mxu0 0.0
    %186 = vmatpush1.msra.mxu0 0.0
    %187 = vmatprep.subr.mxu0 0.0
    %188 = vmatpush1.msra.mxu0 0.0
    %189 = vmatprep.subr.mxu0 0.0
    %190 = vmatpush1.msra.mxu0 0.0
    %191 = vmatprep.subr.mxu0 0.0
    %192 = vmatpush1.msra.mxu0 0.0
    %193 = vmatprep.subr.mxu0 0.0
    %194 = vmatpush1.msra.mxu0 0.0
    %195 = vmatprep.subr.mxu0 0.0
    %196 = vmatpush1.msra.mxu0 0.0
    %197 = vmatprep.subr.mxu0 0.0
    %198 = vmatpush1.msra.mxu0 0.0
    %199 = vmatprep.subr.mxu0 0.0
    %200 = vmatpush1.msra.mxu0 0.0
    %201 = vmatprep.subr.mxu0 0.0
    %202 = vmatpush1.msra.mxu0 0.0
    %203 = vmatprep.subr.mxu0 0.0
    %204 = vmatpush1.msra.mxu0 0.0
    %205 = vmatprep.subr.mxu0 0.0
    %206 = vmatpush1.msra.mxu0 0.0
    %207 = vmatprep.subr.mxu0 0.0
    %208 = vmatpush1.msra.mxu0 0.0
    %209 = vmatprep.mubr.f32.mxu0 0.0
    %210 = vmatmul.mubr.f32.gmra.mrb[0].mxu0 %v143
    %v211 = vpop.f32.mrb[0].mxu0
    %v212 = vadd.f32 %v50, %v211
    %v213 = vpop.f32.mrb[0].mxu0
    %214 = vdwg.mxu0
    %v215 = vtanh.pop %v212
    %v216 = vmul.f32 %v215, 0.5
    %v217 = vadd.f32 %v216, 0.5
    %219 = vrot.lane.b32.xlu0 %v215, 64
    %v220 = vpop.permute.xlu0 %219
    %v222 = vmul.f32 %v217, %v220
    %v223 = vtanh.pop %v222
    %225 = vrot.lane.b32.xlu0 %v223, 96
    %v226 = vpop.permute.xlu0 %225
    %v228 = vmul.f32 %v217, %v226
    %230 = vrot.lane.b32.xlu0 %v228, 32
    %v231 = vpop.permute.xlu0 %230
    %v232 = vsel %vm141, %v231, 0
    %234 = vmatprep.subr.mxu0 %v53
    %235 = vmatpush1.msra.mxu0 %v52
    %236 = vmatprep.subr.mxu0 %v55
    %237 = vmatpush1.msra.mxu0 %v54
    %238 = vmatprep.subr.mxu0 %v57
    %239 = vmatpush1.msra.mxu0 %v56
    %240 = vmatprep.subr.mxu0 %v59
    %241 = vmatpush1.msra.mxu0 %v58
    %242 = vmatprep.subr.mxu0 0.0
    %243 = vmatpush1.msra.mxu0 0.0
    %244 = vmatprep.subr.mxu0 0.0
    %245 = vmatpush1.msra.mxu0 0.0
    %246 = vmatprep.subr.mxu0 0.0
    %247 = vmatpush1.msra.mxu0 0.0
    %248 = vmatprep.subr.mxu0 0.0
    %249 = vmatpush1.msra.mxu0 0.0
    %250 = vmatprep.subr.mxu0 0.0
    %251 = vmatpush1.msra.mxu0 0.0
    %252 = vmatprep.subr.mxu0 0.0
    %253 = vmatpush1.msra.mxu0 0.0
    %254 = vmatprep.subr.mxu0 0.0
    %255 = vmatpush1.msra.mxu0 0.0
    %256 = vmatprep.subr.mxu0 0.0
    %257 = vmatpush1.msra.mxu0 0.0
    %258 = vmatprep.subr.mxu0 0.0
    %259 = vmatpush1.msra.mxu0 0.0
    %260 = vmatprep.subr.mxu0 0.0
    %261 = vmatpush1.msra.mxu0 0.0
    %262 = vmatprep.subr.mxu0 0.0
    %263 = vmatpush1.msra.mxu0 0.0
    %264 = vmatprep.subr.mxu0 0.0
    %265 = vmatpush1.msra.mxu0 0.0
    %266 = vmatprep.subr.mxu0 0.0
    %267 = vmatpush1.msra.mxu0 0.0
    %268 = vmatprep.subr.mxu0 0.0
    %269 = vmatpush1.msra.mxu0 0.0
    %270 = vmatprep.subr.mxu0 0.0
    %271 = vmatpush1.msra.mxu0 0.0
    %272 = vmatprep.subr.mxu0 0.0
    %273 = vmatpush1.msra.mxu0 0.0
    %274 = vmatprep.subr.mxu0 0.0
    %275 = vmatpush1.msra.mxu0 0.0
    %276 = vmatprep.subr.mxu0 0.0
    %277 = vmatpush1.msra.mxu0 0.0
    %278 = vmatprep.subr.mxu0 0.0
    %279 = vmatpush1.msra.mxu0 0.0
    %280 = vmatprep.subr.mxu0 0.0
    %281 = vmatpush1.msra.mxu0 0.0
    %282 = vmatprep.subr.mxu0 0.0
    %283 = vmatpush1.msra.mxu0 0.0
    %284 = vmatprep.subr.mxu0 0.0
    %285 = vmatpush1.msra.mxu0 0.0
    %286 = vmatprep.subr.mxu0 0.0
    %287 = vmatpush1.msra.mxu0 0.0
    %288 = vmatprep.subr.mxu0 0.0
    %289 = vmatpush1.msra.mxu0 0.0
    %290 = vmatprep.subr.mxu0 0.0
    %291 = vmatpush1.msra.mxu0 0.0
    %292 = vmatprep.subr.mxu0 0.0
    %293 = vmatpush1.msra.mxu0 0.0
    %294 = vmatprep.subr.mxu0 0.0
    %295 = vmatpush1.msra.mxu0 0.0
    %296 = vmatprep.subr.mxu0 0.0
    %297 = vmatpush1.msra.mxu0 0.0
    %298 = vmatprep.mubr.f32.mxu0 0.0
    %299 = vmatmul.mubr.f32.gmra.mrb[0].mxu0 %v232
    %v300 = vpop.f32.mrb[0].mxu0
    %v301 = vadd.f32 0.0, %v300
    %v302 = vpop.f32.mrb[0].mxu0
    %v303 = vadd.f32 0.0, %v302
    %304 = vdwg.mxu0
    %v305 = vadd.f32 %v301, %v51
    %v306 = vtanh.pop %v305
    %v307 = vmul.f32 %v306, 0.5
    %v308 = vadd.f32 %v307, 0.5
    %310 = vrot.lane.b32.xlu0 %v306, 64
    %v311 = vpop.permute.xlu0 %310
    %v313 = vmul.f32 %v308, %v311
    %v314 = vtanh.pop %v313
    %316 = vrot.lane.b32.xlu0 %v314, 96
    %v317 = vpop.permute.xlu0 %316
    %v319 = vmul.f32 %v308, %v317
    %321 = vrot.lane.b32.xlu0 %v319, 32
    %v322 = vpop.permute.xlu0 %321
    %v323 = vsel %vm141, %v322, 0
    %325 = vmatprep.subr.mxu0 0.0
    %326 = vmatpush1.msra.mxu0 %v46
    %327 = vmatprep.subr.mxu0 0.0
    %328 = vmatpush1.msra.mxu0 %v47
    %329 = vmatprep.subr.mxu0 0.0
    %330 = vmatpush1.msra.mxu0 %v48
    %331 = vmatprep.subr.mxu0 0.0
    %332 = vmatpush1.msra.mxu0 %v49
    %333 = vmatprep.subr.mxu0 0.0
    %334 = vmatpush1.msra.mxu0 0.0
    %335 = vmatprep.subr.mxu0 0.0
    %336 = vmatpush1.msra.mxu0 0.0
    %337 = vmatprep.subr.mxu0 0.0
    %338 = vmatpush1.msra.mxu0 0.0
    %339 = vmatprep.subr.mxu0 0.0
    %340 = vmatpush1.msra.mxu0 0.0
    %341 = vmatprep.subr.mxu0 0.0
    %342 = vmatpush1.msra.mxu0 0.0
    %343 = vmatprep.subr.mxu0 0.0
    %344 = vmatpush1.msra.mxu0 0.0
    %345 = vmatprep.subr.mxu0 0.0
    %346 = vmatpush1.msra.mxu0 0.0
    %347 = vmatprep.subr.mxu0 0.0
    %348 = vmatpush1.msra.mxu0 0.0
    %349 = vmatprep.subr.mxu0 0.0
    %350 = vmatpush1.msra.mxu0 0.0
    %351 = vmatprep.subr.mxu0 0.0
    %352 = vmatpush1.msra.mxu0 0.0
    %353 = vmatprep.subr.mxu0 0.0
    %354 = vmatpush1.msra.mxu0 0.0
    %355 = vmatprep.subr.mxu0 0.0
    %356 = vmatpush1.msra.mxu0 0.0
    %357 = vmatprep.subr.mxu0 0.0
    %358 = vmatpush1.msra.mxu0 0.0
    %359 = vmatprep.subr.mxu0 0.0
    %360 = vmatpush1.msra.mxu0 0.0
    %361 = vmatprep.subr.mxu0 0.0
    %362 = vmatpush1.msra.mxu0 0.0
    %363 = vmatprep.subr.mxu0 0.0
    %364 = vmatpush1.msra.mxu0 0.0
    %365 = vmatprep.subr.mxu0 0.0
    %366 = vmatpush1.msra.mxu0 0.0
    %367 = vmatprep.subr.mxu0 0.0
    %368 = vmatpush1.msra.mxu0 0.0
    %369 = vmatprep.subr.mxu0 0.0
    %370 = vmatpush1.msra.mxu0 0.0
    %371 = vmatprep.subr.mxu0 0.0
    %372 = vmatpush1.msra.mxu0 0.0
    %373 = vmatprep.subr.mxu0 0.0
    %374 = vmatpush1.msra.mxu0 0.0
    %375 = vmatprep.subr.mxu0 0.0
    %376 = vmatpush1.msra.mxu0 0.0
    %377 = vmatprep.subr.mxu0 0.0
    %378 = vmatpush1.msra.mxu0 0.0
    %379 = vmatprep.subr.mxu0 0.0
    %380 = vmatpush1.msra.mxu0 0.0
    %381 = vmatprep.subr.mxu0 0.0
    %382 = vmatpush1.msra.mxu0 0.0
    %383 = vmatprep.subr.mxu0 0.0
    %384 = vmatpush1.msra.mxu0 0.0
    %385 = vmatprep.subr.mxu0 0.0
    %386 = vmatpush1.msra.mxu0 0.0
    %387 = vmatprep.subr.mxu0 0.0
    %388 = vmatpush1.msra.mxu0 0.0
    %389 = vmatprep.mubr.f32.mxu0 0.0
    %390 = vmatmul.mubr.f32.gmra.mrb[0].mxu0 %v323
    %v391 = vpop.f32.mrb[0].mxu0
    %v392 = vadd.f32 %v51, %v391
    %v393 = vpop.f32.mrb[0].mxu0
    %394 = vdwg.mxu0
    %v396 = vrot.slane %v303, 7
    %v398 = vadd.f32 %v212, %v396
    %v399 = vtanh.pop %v398
    %v400 = vmul.f32 %v399, 0.5
    %v401 = vadd.f32 %v400, 0.5
    %v403 = vrot.slane %v222, 7
    %404 = vrot.lane.b32.xlu0 %v403, 32
    %v405 = vpop.permute.xlu0 %404
    %v407 = vmul.f32 %v401, %v405
    %409 = vrot.lane.b32.xlu0 %v399, 64
    %v410 = vpop.permute.xlu0 %409
    %v412 = vmul.f32 %v401, %v410
    %414 = vrot.lane.b32.xlu0 %v412, 32
    %v415 = vpop.permute.xlu0 %414
    %v417 = vadd.f32 %v407, %v415
    %v418 = vtanh.pop %v417
    %420 = vrot.lane.b32.xlu0 %v418, 64
    %v421 = vpop.permute.xlu0 %420
    %v423 = vmul.f32 %v401, %v421
    %v425 = vrot.slane %v423, 1
    %426 = vrot.lane.b32.xlu0 %v425, 32
    %v427 = vpop.permute.xlu0 %426
    %v428 = vsel %vm141, %v427, 0
    %430 = vmatprep.subr.mxu0 %v53
    %431 = vmatpush1.msra.mxu0 %v52
    %432 = vmatprep.subr.mxu0 %v55
    %433 = vmatpush1.msra.mxu0 %v54
    %434 = vmatprep.subr.mxu0 %v57
    %435 = vmatpush1.msra.mxu0 %v56
    %436 = vmatprep.subr.mxu0 %v59
    %437 = vmatpush1.msra.mxu0 %v58
    %438 = vmatprep.subr.mxu0 0.0
    %439 = vmatpush1.msra.mxu0 0.0
    %440 = vmatprep.subr.mxu0 0.0
    %441 = vmatpush1.msra.mxu0 0.0
    %442 = vmatprep.subr.mxu0 0.0
    %443 = vmatpush1.msra.mxu0 0.0
    %444 = vmatprep.subr.mxu0 0.0
    %445 = vmatpush1.msra.mxu0 0.0
    %446 = vmatprep.subr.mxu0 0.0
    %447 = vmatpush1.msra.mxu0 0.0
    %448 = vmatprep.subr.mxu0 0.0
    %449 = vmatpush1.msra.mxu0 0.0
    %450 = vmatprep.subr.mxu0 0.0
    %451 = vmatpush1.msra.mxu0 0.0
    %452 = vmatprep.subr.mxu0 0.0
    %453 = vmatpush1.msra.mxu0 0.0
    %454 = vmatprep.subr.mxu0 0.0
    %455 = vmatpush1.msra.mxu0 0.0
    %456 = vmatprep.subr.mxu0 0.0
    %457 = vmatpush1.msra.mxu0 0.0
    %458 = vmatprep.subr.mxu0 0.0
    %459 = vmatpush1.msra.mxu0 0.0
    %460 = vmatprep.subr.mxu0 0.0
    %461 = vmatpush1.msra.mxu0 0.0
    %462 = vmatprep.subr.mxu0 0.0
    %463 = vmatpush1.msra.mxu0 0.0
    %464 = vmatprep.subr.mxu0 0.0
    %465 = vmatpush1.msra.mxu0 0.0
    %466 = vmatprep.subr.mxu0 0.0
    %467 = vmatpush1.msra.mxu0 0.0
    %468 = vmatprep.subr.mxu0 0.0
    %469 = vmatpush1.msra.mxu0 0.0
    %470 = vmatprep.subr.mxu0 0.0
    %471 = vmatpush1.msra.mxu0 0.0
    %472 = vmatprep.subr.mxu0 0.0
    %473 = vmatpush1.msra.mxu0 0.0
    %474 = vmatprep.subr.mxu0 0.0
    %475 = vmatpush1.msra.mxu0 0.0
    %476 = vmatprep.subr.mxu0 0.0
    %477 = vmatpush1.msra.mxu0 0.0
    %478 = vmatprep.subr.mxu0 0.0
    %479 = vmatpush1.msra.mxu0 0.0
    %480 = vmatprep.subr.mxu0 0.0
    %481 = vmatpush1.msra.mxu0 0.0
    %482 = vmatprep.subr.mxu0 0.0
    %483 = vmatpush1.msra.mxu0 0.0
    %484 = vmatprep.subr.mxu0 0.0
    %485 = vmatpush1.msra.mxu0 0.0
    %486 = vmatprep.subr.mxu0 0.0
    %487 = vmatpush1.msra.mxu0 0.0
    %488 = vmatprep.subr.mxu0 0.0
    %489 = vmatpush1.msra.mxu0 0.0
    %490 = vmatprep.subr.mxu0 0.0
    %491 = vmatpush1.msra.mxu0 0.0
    %492 = vmatprep.subr.mxu0 0.0
    %493 = vmatpush1.msra.mxu0 0.0
    %494 = vmatprep.mubr.f32.mxu0 0.0
    %495 = vmatmul.mubr.f32.gmra.mrb[0].mxu0 %v428
    %v496 = vpop.f32.mrb[0].mxu0
    %v497 = vadd.f32 0.0, %v496
    %v498 = vpop.f32.mrb[0].mxu0
    %v499 = vadd.f32 0.0, %v498
    %500 = vdwg.mxu0
    %v501 = vadd.f32 %v497, %v392
    %v502 = vtanh.pop %v501
    %v503 = vmul.f32 %v502, 0.5
    %v504 = vadd.f32 %v503, 0.5
    %506 = vrot.lane.b32.xlu0 %v313, 32
    %v507 = vpop.permute.xlu0 %506
    %v509 = vmul.f32 %v504, %v507
    %511 = vrot.lane.b32.xlu0 %v502, 64
    %v512 = vpop.permute.xlu0 %511
    %v514 = vmul.f32 %v504, %v512
    %516 = vrot.lane.b32.xlu0 %v514, 32
    %v517 = vpop.permute.xlu0 %516
    %v519 = vadd.f32 %v509, %v517
    %v520 = vtanh.pop %v519
    %522 = vrot.lane.b32.xlu0 %v520, 64
    %v523 = vpop.permute.xlu0 %522
    %v525 = vmul.f32 %v504, %v523
    %527 = vrot.lane.b32.xlu0 %v525, 32
    %v528 = vpop.permute.xlu0 %527
    %v529 = vsel %vm141, %v528, 0
    %531 = vmatprep.subr.mxu0 0.0
    %532 = vmatpush1.msra.mxu0 %v46
    %533 = vmatprep.subr.mxu0 0.0
    %534 = vmatpush1.msra.mxu0 %v47
    %535 = vmatprep.subr.mxu0 0.0
    %536 = vmatpush1.msra.mxu0 %v48
    %537 = vmatprep.subr.mxu0 0.0
    %538 = vmatpush1.msra.mxu0 %v49
    %539 = vmatprep.subr.mxu0 0.0
    %540 = vmatpush1.msra.mxu0 0.0
    %541 = vmatprep.subr.mxu0 0.0
    %542 = vmatpush1.msra.mxu0 0.0
    %543 = vmatprep.subr.mxu0 0.0
    %544 = vmatpush1.msra.mxu0 0.0
    %545 = vmatprep.subr.mxu0 0.0
    %546 = vmatpush1.msra.mxu0 0.0
    %547 = vmatprep.subr.mxu0 0.0
    %548 = vmatpush1.msra.mxu0 0.0
    %549 = vmatprep.subr.mxu0 0.0
    %550 = vmatpush1.msra.mxu0 0.0
    %551 = vmatprep.subr.mxu0 0.0
    %552 = vmatpush1.msra.mxu0 0.0
    %553 = vmatprep.subr.mxu0 0.0
    %554 = vmatpush1.msra.mxu0 0.0
    %555 = vmatprep.subr.mxu0 0.0
    %556 = vmatpush1.msra.mxu0 0.0
    %557 = vmatprep.subr.mxu0 0.0
    %558 = vmatpush1.msra.mxu0 0.0
    %559 = vmatprep.subr.mxu0 0.0
    %560 = vmatpush1.msra.mxu0 0.0
    %561 = vmatprep.subr.mxu0 0.0
    %562 = vmatpush1.msra.mxu0 0.0
    %563 = vmatprep.subr.mxu0 0.0
    %564 = vmatpush1.msra.mxu0 0.0
    %565 = vmatprep.subr.mxu0 0.0
    %566 = vmatpush1.msra.mxu0 0.0
    %567 = vmatprep.subr.mxu0 0.0
    %568 = vmatpush1.msra.mxu0 0.0
    %569 = vmatprep.subr.mxu0 0.0
    %570 = vmatpush1.msra.mxu0 0.0
    %571 = vmatprep.subr.mxu0 0.0
    %572 = vmatpush1.msra.mxu0 0.0
    %573 = vmatprep.subr.mxu0 0.0
    %574 = vmatpush1.msra.mxu0 0.0
    %575 = vmatprep.subr.mxu0 0.0
    %576 = vmatpush1.msra.mxu0 0.0
    %577 = vmatprep.subr.mxu0 0.0
    %578 = vmatpush1.msra.mxu0 0.0
    %579 = vmatprep.subr.mxu0 0.0
    %580 = vmatpush1.msra.mxu0 0.0
    %581 = vmatprep.subr.mxu0 0.0
    %582 = vmatpush1.msra.mxu0 0.0
    %583 = vmatprep.subr.mxu0 0.0
    %584 = vmatpush1.msra.mxu0 0.0
    %585 = vmatprep.subr.mxu0 0.0
    %586 = vmatpush1.msra.mxu0 0.0
    %587 = vmatprep.subr.mxu0 0.0
    %588 = vmatpush1.msra.mxu0 0.0
    %589 = vmatprep.subr.mxu0 0.0
    %590 = vmatpush1.msra.mxu0 0.0
    %591 = vmatprep.subr.mxu0 0.0
    %592 = vmatpush1.msra.mxu0 0.0
    %593 = vmatprep.subr.mxu0 0.0
    %594 = vmatpush1.msra.mxu0 0.0
    %595 = vmatprep.mubr.f32.mxu0 0.0
    %596 = vmatmul.mubr.f32.gmra.mrb[0].mxu0 %v529
    %v597 = vpop.f32.mrb[0].mxu0
    %v598 = vadd.f32 %v51, %v597
    %v599 = vpop.f32.mrb[0].mxu0
    %600 = vdwg.mxu0
    %v602 = vrot.slane %v499, 6
    %v604 = vadd.f32 %v212, %v602
    %v605 = vtanh.pop %v604
    %v606 = vmul.f32 %v605, 0.5
    %v607 = vadd.f32 %v606, 0.5
    %v609 = vrot.slane %v417, 7
    %v611 = vmul.f32 %v607, %v609
    %613 = vrot.lane.b32.xlu0 %v605, 64
    %v614 = vpop.permute.xlu0 %613
    %v616 = vmul.f32 %v607, %v614
    %618 = vrot.lane.b32.xlu0 %v616, 32
    %v619 = vpop.permute.xlu0 %618
    %v621 = vadd.f32 %v611, %v619
    %v622 = vtanh.pop %v621
    %624 = vrot.lane.b32.xlu0 %v622, 64
    %v625 = vpop.permute.xlu0 %624
    %v627 = vmul.f32 %v607, %v625
    %v629 = vrot.slane %v627, 2
    %630 = vrot.lane.b32.xlu0 %v629, 32
    %v631 = vpop.permute.xlu0 %630
    %v632 = vsel %vm141, %v631, 0
    %634 = vmatprep.subr.mxu0 %v53
    %635 = vmatpush1.msra.mxu0 %v52
    %636 = vmatprep.subr.mxu0 %v55
    %637 = vmatpush1.msra.mxu0 %v54
    %638 = vmatprep.subr.mxu0 %v57
    %639 = vmatpush1.msra.mxu0 %v56
    %640 = vmatprep.subr.mxu0 %v59
    %641 = vmatpush1.msra.mxu0 %v58
    %642 = vmatprep.subr.mxu0 0.0
    %643 = vmatpush1.msra.mxu0 0.0
    %644 = vmatprep.subr.mxu0 0.0
    %645 = vmatpush1.msra.mxu0 0.0
    %646 = vmatprep.subr.mxu0 0.0
    %647 = vmatpush1.msra.mxu0 0.0
    %648 = vmatprep.subr.mxu0 0.0
    %649 = vmatpush1.msra.mxu0 0.0
    %650 = vmatprep.subr.mxu0 0.0
    %651 = vmatpush1.msra.mxu0 0.0
    %652 = vmatprep.subr.mxu0 0.0
    %653 = vmatpush1.msra.mxu0 0.0
    %654 = vmatprep.subr.mxu0 0.0
    %655 = vmatpush1.msra.mxu0 0.0
    %656 = vmatprep.subr.mxu0 0.0
    %657 = vmatpush1.msra.mxu0 0.0
    %658 = vmatprep.subr.mxu0 0.0
    %659 = vmatpush1.msra.mxu0 0.0
    %660 = vmatprep.subr.mxu0 0.0
    %661 = vmatpush1.msra.mxu0 0.0
    %662 = vmatprep.subr.mxu0 0.0
    %663 = vmatpush1.msra.mxu0 0.0
    %664 = vmatprep.subr.mxu0 0.0
    %665 = vmatpush1.msra.mxu0 0.0
    %666 = vmatprep.subr.mxu0 0.0
    %667 = vmatpush1.msra.mxu0 0.0
    %668 = vmatprep.subr.mxu0 0.0
    %669 = vmatpush1.msra.mxu0 0.0
    %670 = vmatprep.subr.mxu0 0.0
    %671 = vmatpush1.msra.mxu0 0.0
    %672 = vmatprep.subr.mxu0 0.0
    %673 = vmatpush1.msra.mxu0 0.0
    %674 = vmatprep.subr.mxu0 0.0
    %675 = vmatpush1.msra.mxu0 0.0
    %676 = vmatprep.subr.mxu0 0.0
    %677 = vmatpush1.msra.mxu0 0.0
    %678 = vmatprep.subr.mxu0 0.0
    %679 = vmatpush1.msra.mxu0 0.0
    %680 = vmatprep.subr.mxu0 0.0
    %681 = vmatpush1.msra.mxu0 0.0
    %682 = vmatprep.subr.mxu0 0.0
    %683 = vmatpush1.msra.mxu0 0.0
    %684 = vmatprep.subr.mxu0 0.0
    %685 = vmatpush1.msra.mxu0 0.0
    %686 = vmatprep.subr.mxu0 0.0
    %687 = vmatpush1.msra.mxu0 0.0
    %688 = vmatprep.subr.mxu0 0.0
    %689 = vmatpush1.msra.mxu0 0.0
    %690 = vmatprep.subr.mxu0 0.0
    %691 = vmatpush1.msra.mxu0 0.0
    %692 = vmatprep.subr.mxu0 0.0
    %693 = vmatpush1.msra.mxu0 0.0
    %694 = vmatprep.subr.mxu0 0.0
    %695 = vmatpush1.msra.mxu0 0.0
    %696 = vmatprep.subr.mxu0 0.0
    %697 = vmatpush1.msra.mxu0 0.0
    %698 = vmatprep.mubr.f32.mxu0 0.0
    %699 = vmatmul.mubr.f32.gmra.mrb[0].mxu0 %v632
    %v700 = vpop.f32.mrb[0].mxu0
    %v701 = vadd.f32 0.0, %v700
    %v702 = vpop.f32.mrb[0].mxu0
    %v703 = vadd.f32 0.0, %v702
    %704 = vdwg.mxu0
    %v705 = vadd.f32 %v701, %v598
    %v706 = vtanh.pop %v705
    %v707 = vmul.f32 %v706, 0.5
    %v708 = vadd.f32 %v707, 0.5
    %v709 = vmul.f32 %v708, %v519
    %711 = vrot.lane.b32.xlu0 %v706, 64
    %v712 = vpop.permute.xlu0 %711
    %v714 = vmul.f32 %v708, %v712
    %716 = vrot.lane.b32.xlu0 %v714, 32
    %v717 = vpop.permute.xlu0 %716
    %v719 = vadd.f32 %v709, %v717
    %v720 = vtanh.pop %v719
    %722 = vrot.lane.b32.xlu0 %v720, 64
    %v723 = vpop.permute.xlu0 %722
    %v725 = vmul.f32 %v708, %v723
    %727 = vrot.lane.b32.xlu0 %v725, 32
    %v728 = vpop.permute.xlu0 %727
    %v729 = vsel %vm141, %v728, 0
    %731 = vmatprep.subr.mxu0 0.0
    %732 = vmatpush1.msra.mxu0 %v46
    %733 = vmatprep.subr.mxu0 0.0
    %734 = vmatpush1.msra.mxu0 %v47
    %735 = vmatprep.subr.mxu0 0.0
    %736 = vmatpush1.msra.mxu0 %v48
    %737 = vmatprep.subr.mxu0 0.0
    %738 = vmatpush1.msra.mxu0 %v49
    %739 = vmatprep.subr.mxu0 0.0
    %740 = vmatpush1.msra.mxu0 0.0
    %741 = vmatprep.subr.mxu0 0.0
    %742 = vmatpush1.msra.mxu0 0.0
    %743 = vmatprep.subr.mxu0 0.0
    %744 = vmatpush1.msra.mxu0 0.0
    %745 = vmatprep.subr.mxu0 0.0
    %746 = vmatpush1.msra.mxu0 0.0
    %747 = vmatprep.subr.mxu0 0.0
    %748 = vmatpush1.msra.mxu0 0.0
    %749 = vmatprep.subr.mxu0 0.0
    %750 = vmatpush1.msra.mxu0 0.0
    %751 = vmatprep.subr.mxu0 0.0
    %752 = vmatpush1.msra.mxu0 0.0
    %753 = vmatprep.subr.mxu0 0.0
    %754 = vmatpush1.msra.mxu0 0.0
    %755 = vmatprep.subr.mxu0 0.0
    %756 = vmatpush1.msra.mxu0 0.0
    %757 = vmatprep.subr.mxu0 0.0
    %758 = vmatpush1.msra.mxu0 0.0
    %759 = vmatprep.subr.mxu0 0.0
    %760 = vmatpush1.msra.mxu0 0.0
    %761 = vmatprep.subr.mxu0 0.0
    %762 = vmatpush1.msra.mxu0 0.0
    %763 = vmatprep.subr.mxu0 0.0
    %764 = vmatpush1.msra.mxu0 0.0
    %765 = vmatprep.subr.mxu0 0.0
    %766 = vmatpush1.msra.mxu0 0.0
    %767 = vmatprep.subr.mxu0 0.0
    %768 = vmatpush1.msra.mxu0 0.0
    %769 = vmatprep.subr.mxu0 0.0
    %770 = vmatpush1.msra.mxu0 0.0
    %771 = vmatprep.subr.mxu0 0.0
    %772 = vmatpush1.msra.mxu0 0.0
    %773 = vmatprep.subr.mxu0 0.0
    %774 = vmatpush1.msra.mxu0 0.0
    %775 = vmatprep.subr.mxu0 0.0
    %776 = vmatpush1.msra.mxu0 0.0
    %777 = vmatprep.subr.mxu0 0.0
    %778 = vmatpush1.msra.mxu0 0.0
    %779 = vmatprep.subr.mxu0 0.0
    %780 = vmatpush1.msra.mxu0 0.0
    %781 = vmatprep.subr.mxu0 0.0
    %782 = vmatpush1.msra.mxu0 0.0
    %783 = vmatprep.subr.mxu0 0.0
    %784 = vmatpush1.msra.mxu0 0.0
    %785 = vmatprep.subr.mxu0 0.0
    %786 = vmatpush1.msra.mxu0 0.0
    %787 = vmatprep.subr.mxu0 0.0
    %788 = vmatpush1.msra.mxu0 0.0
    %789 = vmatprep.subr.mxu0 0.0
    %790 = vmatpush1.msra.mxu0 0.0
    %791 = vmatprep.subr.mxu0 0.0
    %792 = vmatpush1.msra.mxu0 0.0
    %793 = vmatprep.subr.mxu0 0.0
    %794 = vmatpush1.msra.mxu0 0.0
    %795 = vmatprep.mubr.f32.mxu0 0.0
    %796 = vmatmul.mubr.f32.gmra.mrb[0].mxu0 %v729
    %v797 = vpop.f32.mrb[0].mxu0
    %v798 = vadd.f32 %v51, %v797
    %v799 = vpop.f32.mrb[0].mxu0
    %800 = vdwg.mxu0
    %v802 = vrot.slane %v703, 5
    %v804 = vadd.f32 %v212, %v802
    %v805 = vtanh.pop %v804
    %v806 = vmul.f32 %v805, 0.5
    %v807 = vadd.f32 %v806, 0.5
    %v809 = vrot.slane %v621, 7
    %v811 = vmul.f32 %v807, %v809
    %813 = vrot.lane.b32.xlu0 %v805, 64
    %v814 = vpop.permute.xlu0 %813
    %v816 = vmul.f32 %v807, %v814
    %818 = vrot.lane.b32.xlu0 %v816, 32
    %v819 = vpop.permute.xlu0 %818
    %v821 = vadd.f32 %v811, %v819
    %v822 = vtanh.pop %v821
    %824 = vrot.lane.b32.xlu0 %v822, 64
    %v825 = vpop.permute.xlu0 %824
    %v827 = vmul.f32 %v807, %v825
    %v829 = vrot.slane %v827, 3
    %830 = vrot.lane.b32.xlu0 %v829, 32
    %v831 = vpop.permute.xlu0 %830
    %v832 = vsel %vm141, %v831, 0
    %834 = vmatprep.subr.mxu0 %v53
    %835 = vmatpush1.msra.mxu0 %v52
    %836 = vmatprep.subr.mxu0 %v55
    %837 = vmatpush1.msra.mxu0 %v54
    %838 = vmatprep.subr.mxu0 %v57
    %839 = vmatpush1.msra.mxu0 %v56
    %840 = vmatprep.subr.mxu0 %v59
    %841 = vmatpush1.msra.mxu0 %v58
    %842 = vmatprep.subr.mxu0 0.0
    %843 = vmatpush1.msra.mxu0 0.0
    %844 = vmatprep.subr.mxu0 0.0
    %845 = vmatpush1.msra.mxu0 0.0
    %846 = vmatprep.subr.mxu0 0.0
    %847 = vmatpush1.msra.mxu0 0.0
    %848 = vmatprep.subr.mxu0 0.0
    %849 = vmatpush1.msra.mxu0 0.0
    %850 = vmatprep.subr.mxu0 0.0
    %851 = vmatpush1.msra.mxu0 0.0
    %852 = vmatprep.subr.mxu0 0.0
    %853 = vmatpush1.msra.mxu0 0.0
    %854 = vmatprep.subr.mxu0 0.0
    %855 = vmatpush1.msra.mxu0 0.0
    %856 = vmatprep.subr.mxu0 0.0
    %857 = vmatpush1.msra.mxu0 0.0
    %858 = vmatprep.subr.mxu0 0.0
    %859 = vmatpush1.msra.mxu0 0.0
    %860 = vmatprep.subr.mxu0 0.0
    %861 = vmatpush1.msra.mxu0 0.0
    %862 = vmatprep.subr.mxu0 0.0
    %863 = vmatpush1.msra.mxu0 0.0
    %864 = vmatprep.subr.mxu0 0.0
    %865 = vmatpush1.msra.mxu0 0.0
    %866 = vmatprep.subr.mxu0 0.0
    %867 = vmatpush1.msra.mxu0 0.0
    %868 = vmatprep.subr.mxu0 0.0
    %869 = vmatpush1.msra.mxu0 0.0
    %870 = vmatprep.subr.mxu0 0.0
    %871 = vmatpush1.msra.mxu0 0.0
    %872 = vmatprep.subr.mxu0 0.0
    %873 = vmatpush1.msra.mxu0 0.0
    %874 = vmatprep.subr.mxu0 0.0
    %875 = vmatpush1.msra.mxu0 0.0
    %876 = vmatprep.subr.mxu0 0.0
    %877 = vmatpush1.msra.mxu0 0.0
    %878 = vmatprep.subr.mxu0 0.0
    %879 = vmatpush1.msra.mxu0 0.0
    %880 = vmatprep.subr.mxu0 0.0
    %881 = vmatpush1.msra.mxu0 0.0
    %882 = vmatprep.subr.mxu0 0.0
    %883 = vmatpush1.msra.mxu0 0.0
    %884 = vmatprep.subr.mxu0 0.0
    %885 = vmatpush1.msra.mxu0 0.0
    %886 = vmatprep.subr.mxu0 0.0
    %887 = vmatpush1.msra.mxu0 0.0
    %888 = vmatprep.subr.mxu0 0.0
    %889 = vmatpush1.msra.mxu0 0.0
    %890 = vmatprep.subr.mxu0 0.0
    %891 = vmatpush1.msra.mxu0 0.0
    %892 = vmatprep.subr.mxu0 0.0
    %893 = vmatpush1.msra.mxu0 0.0
    %894 = vmatprep.subr.mxu0 0.0
    %895 = vmatpush1.msra.mxu0 0.0
    %896 = vmatprep.subr.mxu0 0.0
    %897 = vmatpush1.msra.mxu0 0.0
    %898 = vmatprep.mubr.f32.mxu0 0.0
    %899 = vmatmul.mubr.f32.gmra.mrb[0].mxu0 %v832
    %v900 = vpop.f32.mrb[0].mxu0
    %v901 = vadd.f32 0.0, %v900
    %v902 = vpop.f32.mrb[0].mxu0
    %v903 = vadd.f32 0.0, %v902
    %904 = vdwg.mxu0
    %v905 = vadd.f32 %v901, %v798
    %v906 = vtanh.pop %v905
    %v907 = vmul.f32 %v906, 0.5
    %v908 = vadd.f32 %v907, 0.5
    %v909 = vmul.f32 %v908, %v719
    %911 = vrot.lane.b32.xlu0 %v906, 64
    %v912 = vpop.permute.xlu0 %911
    %v914 = vmul.f32 %v908, %v912
    %916 = vrot.lane.b32.xlu0 %v914, 32
    %v917 = vpop.permute.xlu0 %916
    %v919 = vadd.f32 %v909, %v917
    %v920 = vtanh.pop %v919
    %922 = vrot.lane.b32.xlu0 %v920, 64
    %v923 = vpop.permute.xlu0 %922
    %v925 = vmul.f32 %v908, %v923
    %927 = vrot.lane.b32.xlu0 %v925, 32
    %v928 = vpop.permute.xlu0 %927
    %v929 = vsel %vm141, %v928, 0
    %931 = vmatprep.subr.mxu0 0.0
    %932 = vmatpush1.msra.mxu0 %v46
    %933 = vmatprep.subr.mxu0 0.0
    %934 = vmatpush1.msra.mxu0 %v47
    %935 = vmatprep.subr.mxu0 0.0
    %936 = vmatpush1.msra.mxu0 %v48
    %937 = vmatprep.subr.mxu0 0.0
    %938 = vmatpush1.msra.mxu0 %v49
    %939 = vmatprep.subr.mxu0 0.0
    %940 = vmatpush1.msra.mxu0 0.0
    %941 = vmatprep.subr.mxu0 0.0
    %942 = vmatpush1.msra.mxu0 0.0
    %943 = vmatprep.subr.mxu0 0.0
    %944 = vmatpush1.msra.mxu0 0.0
    %945 = vmatprep.subr.mxu0 0.0
    %946 = vmatpush1.msra.mxu0 0.0
    %947 = vmatprep.subr.mxu0 0.0
    %948 = vmatpush1.msra.mxu0 0.0
    %949 = vmatprep.subr.mxu0 0.0
    %950 = vmatpush1.msra.mxu0 0.0
    %951 = vmatprep.subr.mxu0 0.0
    %952 = vmatpush1.msra.mxu0 0.0
    %953 = vmatprep.subr.mxu0 0.0
    %954 = vmatpush1.msra.mxu0 0.0
    %955 = vmatprep.subr.mxu0 0.0
    %956 = vmatpush1.msra.mxu0 0.0
    %957 = vmatprep.subr.mxu0 0.0
    %958 = vmatpush1.msra.mxu0 0.0
    %959 = vmatprep.subr.mxu0 0.0
    %960 = vmatpush1.msra.mxu0 0.0
    %961 = vmatprep.subr.mxu0 0.0
    %962 = vmatpush1.msra.mxu0 0.0
    %963 = vmatprep.subr.mxu0 0.0
    %964 = vmatpush1.msra.mxu0 0.0
    %965 = vmatprep.subr.mxu0 0.0
    %966 = vmatpush1.msra.mxu0 0.0
    %967 = vmatprep.subr.mxu0 0.0
    %968 = vmatpush1.msra.mxu0 0.0
    %969 = vmatprep.subr.mxu0 0.0
    %970 = vmatpush1.msra.mxu0 0.0
    %971 = vmatprep.subr.mxu0 0.0
    %972 = vmatpush1.msra.mxu0 0.0
    %973 = vmatprep.subr.mxu0 0.0
    %974 = vmatpush1.msra.mxu0 0.0
    %975 = vmatprep.subr.mxu0 0.0
    %976 = vmatpush1.msra.mxu0 0.0
    %977 = vmatprep.subr.mxu0 0.0
    %978 = vmatpush1.msra.mxu0 0.0
    %979 = vmatprep.subr.mxu0 0.0
    %980 = vmatpush1.msra.mxu0 0.0
    %981 = vmatprep.subr.mxu0 0.0
    %982 = vmatpush1.msra.mxu0 0.0
    %983 = vmatprep.subr.mxu0 0.0
    %984 = vmatpush1.msra.mxu0 0.0
    %985 = vmatprep.subr.mxu0 0.0
    %986 = vmatpush1.msra.mxu0 0.0
    %987 = vmatprep.subr.mxu0 0.0
    %988 = vmatpush1.msra.mxu0 0.0
    %989 = vmatprep.subr.mxu0 0.0
    %990 = vmatpush1.msra.mxu0 0.0
    %991 = vmatprep.subr.mxu0 0.0
    %992 = vmatpush1.msra.mxu0 0.0
    %993 = vmatprep.subr.mxu0 0.0
    %994 = vmatpush1.msra.mxu0 0.0
    %995 = vmatprep.mubr.f32.mxu0 0.0
    %996 = vmatmul.mubr.f32.gmra.mrb[0].mxu0 %v929
    %v997 = vpop.f32.mrb[0].mxu0
    %v998 = vadd.f32 %v51, %v997
    %v999 = vpop.f32.mrb[0].mxu0
    %1000 = vdwg.mxu0
    %v1002 = vrot.slane %v903, 4
    %v1004 = vadd.f32 %v212, %v1002
    %v1005 = vtanh.pop %v1004
    %v1006 = vmul.f32 %v1005, 0.5
    %v1007 = vadd.f32 %v1006, 0.5
    %v1009 = vrot.slane %v821, 7
    %v1011 = vmul.f32 %v1007, %v1009
    %1013 = vrot.lane.b32.xlu0 %v1005, 64
    %v1014 = vpop.permute.xlu0 %1013
    %v1016 = vmul.f32 %v1007, %v1014
    %1018 = vrot.lane.b32.xlu0 %v1016, 32
    %v1019 = vpop.permute.xlu0 %1018
    %v1021 = vadd.f32 %v1011, %v1019
    %v1022 = vtanh.pop %v1021
    %1024 = vrot.lane.b32.xlu0 %v1022, 64
    %v1025 = vpop.permute.xlu0 %1024
    %v1027 = vmul.f32 %v1007, %v1025
    %v1029 = vrot.slane %v1027, 4
    %1030 = vrot.lane.b32.xlu0 %v1029, 32
    %v1031 = vpop.permute.xlu0 %1030
    %v1032 = vsel %vm141, %v1031, 0
    %1034 = vmatprep.subr.mxu0 %v53
    %1035 = vmatpush1.msra.mxu0 %v52
    %1036 = vmatprep.subr.mxu0 %v55
    %1037 = vmatpush1.msra.mxu0 %v54
    %1038 = vmatprep.subr.mxu0 %v57
    %1039 = vmatpush1.msra.mxu0 %v56
    %1040 = vmatprep.subr.mxu0 %v59
    %1041 = vmatpush1.msra.mxu0 %v58
    %1042 = vmatprep.subr.mxu0 0.0
    %1043 = vmatpush1.msra.mxu0 0.0
    %1044 = vmatprep.subr.mxu0 0.0
    %1045 = vmatpush1.msra.mxu0 0.0
    %1046 = vmatprep.subr.mxu0 0.0
    %1047 = vmatpush1.msra.mxu0 0.0
    %1048 = vmatprep.subr.mxu0 0.0
    %1049 = vmatpush1.msra.mxu0 0.0
    %1050 = vmatprep.subr.mxu0 0.0
    %1051 = vmatpush1.msra.mxu0 0.0
    %1052 = vmatprep.subr.mxu0 0.0
    %1053 = vmatpush1.msra.mxu0 0.0
    %1054 = vmatprep.subr.mxu0 0.0
    %1055 = vmatpush1.msra.mxu0 0.0
    %1056 = vmatprep.subr.mxu0 0.0
    %1057 = vmatpush1.msra.mxu0 0.0
    %1058 = vmatprep.subr.mxu0 0.0
    %1059 = vmatpush1.msra.mxu0 0.0
    %1060 = vmatprep.subr.mxu0 0.0
    %1061 = vmatpush1.msra.mxu0 0.0
    %1062 = vmatprep.subr.mxu0 0.0
    %1063 = vmatpush1.msra.mxu0 0.0
    %1064 = vmatprep.subr.mxu0 0.0
    %1065 = vmatpush1.msra.mxu0 0.0
    %1066 = vmatprep.subr.mxu0 0.0
    %1067 = vmatpush1.msra.mxu0 0.0
    %1068 = vmatprep.subr.mxu0 0.0
    %1069 = vmatpush1.msra.mxu0 0.0
    %1070 = vmatprep.subr.mxu0 0.0
    %1071 = vmatpush1.msra.mxu0 0.0
    %1072 = vmatprep.subr.mxu0 0.0
    %1073 = vmatpush1.msra.mxu0 0.0
    %1074 = vmatprep.subr.mxu0 0.0
    %1075 = vmatpush1.msra.mxu0 0.0
    %1076 = vmatprep.subr.mxu0 0.0
    %1077 = vmatpush1.msra.mxu0 0.0
    %1078 = vmatprep.subr.mxu0 0.0
    %1079 = vmatpush1.msra.mxu0 0.0
    %1080 = vmatprep.subr.mxu0 0.0
    %1081 = vmatpush1.msra.mxu0 0.0
    %1082 = vmatprep.subr.mxu0 0.0
    %1083 = vmatpush1.msra.mxu0 0.0
    %1084 = vmatprep.subr.mxu0 0.0
    %1085 = vmatpush1.msra.mxu0 0.0
    %1086 = vmatprep.subr.mxu0 0.0
    %1087 = vmatpush1.msra.mxu0 0.0
    %1088 = vmatprep.subr.mxu0 0.0
    %1089 = vmatpush1.msra.mxu0 0.0
    %1090 = vmatprep.subr.mxu0 0.0
    %1091 = vmatpush1.msra.mxu0 0.0
    %1092 = vmatprep.subr.mxu0 0.0
    %1093 = vmatpush1.msra.mxu0 0.0
    %1094 = vmatprep.subr.mxu0 0.0
    %1095 = vmatpush1.msra.mxu0 0.0
    %1096 = vmatprep.subr.mxu0 0.0
    %1097 = vmatpush1.msra.mxu0 0.0
    %1098 = vmatprep.mubr.f32.mxu0 0.0
    %1099 = vmatmul.mubr.f32.gmra.mrb[0].mxu0 %v1032
    %v1100 = vpop.f32.mrb[0].mxu0
    %v1101 = vadd.f32 0.0, %v1100
    %v1102 = vpop.f32.mrb[0].mxu0
    %v1103 = vadd.f32 0.0, %v1102
    %1104 = vdwg.mxu0
    %v1105 = vadd.f32 %v1101, %v998
    %v1106 = vtanh.pop %v1105
    %v1107 = vmul.f32 %v1106, 0.5
    %v1108 = vadd.f32 %v1107, 0.5
    %v1109 = vmul.f32 %v1108, %v919
    %1111 = vrot.lane.b32.xlu0 %v1106, 64
    %v1112 = vpop.permute.xlu0 %1111
    %v1114 = vmul.f32 %v1108, %v1112
    %1116 = vrot.lane.b32.xlu0 %v1114, 32
    %v1117 = vpop.permute.xlu0 %1116
    %v1119 = vadd.f32 %v1109, %v1117
    %v1120 = vtanh.pop %v1119
    %1122 = vrot.lane.b32.xlu0 %v1120, 64
    %v1123 = vpop.permute.xlu0 %1122
    %v1125 = vmul.f32 %v1108, %v1123
    %1127 = vrot.lane.b32.xlu0 %v1125, 32
    %v1128 = vpop.permute.xlu0 %1127
    %v1129 = vsel %vm141, %v1128, 0
    %1131 = vmatprep.subr.mxu0 0.0
    %1132 = vmatpush1.msra.mxu0 %v46
    %1133 = vmatprep.subr.mxu0 0.0
    %1134 = vmatpush1.msra.mxu0 %v47
    %1135 = vmatprep.subr.mxu0 0.0
    %1136 = vmatpush1.msra.mxu0 %v48
    %1137 = vmatprep.subr.mxu0 0.0
    %1138 = vmatpush1.msra.mxu0 %v49
    %1139 = vmatprep.subr.mxu0 0.0
    %1140 = vmatpush1.msra.mxu0 0.0
    %1141 = vmatprep.subr.mxu0 0.0
    %1142 = vmatpush1.msra.mxu0 0.0
    %1143 = vmatprep.subr.mxu0 0.0
    %1144 = vmatpush1.msra.mxu0 0.0
    %1145 = vmatprep.subr.mxu0 0.0
    %1146 = vmatpush1.msra.mxu0 0.0
    %1147 = vmatprep.subr.mxu0 0.0
    %1148 = vmatpush1.msra.mxu0 0.0
    %1149 = vmatprep.subr.mxu0 0.0
    %1150 = vmatpush1.msra.mxu0 0.0
    %1151 = vmatprep.subr.mxu0 0.0
    %1152 = vmatpush1.msra.mxu0 0.0
    %1153 = vmatprep.subr.mxu0 0.0
    %1154 = vmatpush1.msra.mxu0 0.0
    %1155 = vmatprep.subr.mxu0 0.0
    %1156 = vmatpush1.msra.mxu0 0.0
    %1157 = vmatprep.subr.mxu0 0.0
    %1158 = vmatpush1.msra.mxu0 0.0
    %1159 = vmatprep.subr.mxu0 0.0
    %1160 = vmatpush1.msra.mxu0 0.0
    %1161 = vmatprep.subr.mxu0 0.0
    %1162 = vmatpush1.msra.mxu0 0.0
    %1163 = vmatprep.subr.mxu0 0.0
    %1164 = vmatpush1.msra.mxu0 0.0
    %1165 = vmatprep.subr.mxu0 0.0
    %1166 = vmatpush1.msra.mxu0 0.0
    %1167 = vmatprep.subr.mxu0 0.0
    %1168 = vmatpush1.msra.mxu0 0.0
    %1169 = vmatprep.subr.mxu0 0.0
    %1170 = vmatpush1.msra.mxu0 0.0
    %1171 = vmatprep.subr.mxu0 0.0
    %1172 = vmatpush1.msra.mxu0 0.0
    %1173 = vmatprep.subr.mxu0 0.0
    %1174 = vmatpush1.msra.mxu0 0.0
    %1175 = vmatprep.subr.mxu0 0.0
    %1176 = vmatpush1.msra.mxu0 0.0
    %1177 = vmatprep.subr.mxu0 0.0
    %1178 = vmatpush1.msra.mxu0 0.0
    %1179 = vmatprep.subr.mxu0 0.0
    %1180 = vmatpush1.msra.mxu0 0.0
    %1181 = vmatprep.subr.mxu0 0.0
    %1182 = vmatpush1.msra.mxu0 0.0
    %1183 = vmatprep.subr.mxu0 0.0
    %1184 = vmatpush1.msra.mxu0 0.0
    %1185 = vmatprep.subr.mxu0 0.0
    %1186 = vmatpush1.msra.mxu0 0.0
    %1187 = vmatprep.subr.mxu0 0.0
    %1188 = vmatpush1.msra.mxu0 0.0
    %1189 = vmatprep.subr.mxu0 0.0
    %1190 = vmatpush1.msra.mxu0 0.0
    %1191 = vmatprep.subr.mxu0 0.0
    %1192 = vmatpush1.msra.mxu0 0.0
    %1193 = vmatprep.subr.mxu0 0.0
    %1194 = vmatpush1.msra.mxu0 0.0
    %1195 = vmatprep.mubr.f32.mxu0 0.0
    %1196 = vmatmul.mubr.f32.gmra.mrb[0].mxu0 %v1129
    %v1197 = vpop.f32.mrb[0].mxu0
    %v1198 = vadd.f32 %v51, %v1197
    %v1199 = vpop.f32.mrb[0].mxu0
    %1200 = vdwg.mxu0
    %v1202 = vrot.slane %v1103, 3
    %v1204 = vadd.f32 %v212, %v1202
    %v1205 = vtanh.pop %v1204
    %v1206 = vmul.f32 %v1205, 0.5
    %v1207 = vadd.f32 %v1206, 0.5
    %v1209 = vrot.slane %v1021, 7
    %v1211 = vmul.f32 %v1207, %v1209
    %1213 = vrot.lane.b32.xlu0 %v1205, 64
    %v1214 = vpop.permute.xlu0 %1213
    %v1216 = vmul.f32 %v1207, %v1214
    %1218 = vrot.lane.b32.xlu0 %v1216, 32
    %v1219 = vpop.permute.xlu0 %1218
    %v1221 = vadd.f32 %v1211, %v1219
    %v1222 = vtanh.pop %v1221
    %1224 = vrot.lane.b32.xlu0 %v1222, 64
    %v1225 = vpop.permute.xlu0 %1224
    %v1227 = vmul.f32 %v1207, %v1225
    %v1229 = vrot.slane %v1227, 5
    %1230 = vrot.lane.b32.xlu0 %v1229, 32
    %v1231 = vpop.permute.xlu0 %1230
    %v1232 = vsel %vm141, %v1231, 0
    %1234 = vmatprep.subr.mxu0 %v53
    %1235 = vmatpush1.msra.mxu0 %v52
    %1236 = vmatprep.subr.mxu0 %v55
    %1237 = vmatpush1.msra.mxu0 %v54
    %1238 = vmatprep.subr.mxu0 %v57
    %1239 = vmatpush1.msra.mxu0 %v56
    %1240 = vmatprep.subr.mxu0 %v59
    %1241 = vmatpush1.msra.mxu0 %v58
    %1242 = vmatprep.subr.mxu0 0.0
    %1243 = vmatpush1.msra.mxu0 0.0
    %1244 = vmatprep.subr.mxu0 0.0
    %1245 = vmatpush1.msra.mxu0 0.0
    %1246 = vmatprep.subr.mxu0 0.0
    %1247 = vmatpush1.msra.mxu0 0.0
    %1248 = vmatprep.subr.mxu0 0.0
    %1249 = vmatpush1.msra.mxu0 0.0
    %1250 = vmatprep.subr.mxu0 0.0
    %1251 = vmatpush1.msra.mxu0 0.0
    %1252 = vmatprep.subr.mxu0 0.0
    %1253 = vmatpush1.msra.mxu0 0.0
    %1254 = vmatprep.subr.mxu0 0.0
    %1255 = vmatpush1.msra.mxu0 0.0
    %1256 = vmatprep.subr.mxu0 0.0
    %1257 = vmatpush1.msra.mxu0 0.0
    %1258 = vmatprep.subr.mxu0 0.0
    %1259 = vmatpush1.msra.mxu0 0.0
    %1260 = vmatprep.subr.mxu0 0.0
    %1261 = vmatpush1.msra.mxu0 0.0
    %1262 = vmatprep.subr.mxu0 0.0
    %1263 = vmatpush1.msra.mxu0 0.0
    %1264 = vmatprep.subr.mxu0 0.0
    %1265 = vmatpush1.msra.mxu0 0.0
    %1266 = vmatprep.subr.mxu0 0.0
    %1267 = vmatpush1.msra.mxu0 0.0
    %1268 = vmatprep.subr.mxu0 0.0
    %1269 = vmatpush1.msra.mxu0 0.0
    %1270 = vmatprep.subr.mxu0 0.0
    %1271 = vmatpush1.msra.mxu0 0.0
    %1272 = vmatprep.subr.mxu0 0.0
    %1273 = vmatpush1.msra.mxu0 0.0
    %1274 = vmatprep.subr.mxu0 0.0
    %1275 = vmatpush1.msra.mxu0 0.0
    %1276 = vmatprep.subr.mxu0 0.0
    %1277 = vmatpush1.msra.mxu0 0.0
    %1278 = vmatprep.subr.mxu0 0.0
    %1279 = vmatpush1.msra.mxu0 0.0
    %1280 = vmatprep.subr.mxu0 0.0
    %1281 = vmatpush1.msra.mxu0 0.0
    %1282 = vmatprep.subr.mxu0 0.0
    %1283 = vmatpush1.msra.mxu0 0.0
    %1284 = vmatprep.subr.mxu0 0.0
    %1285 = vmatpush1.msra.mxu0 0.0
    %1286 = vmatprep.subr.mxu0 0.0
    %1287 = vmatpush1.msra.mxu0 0.0
    %1288 = vmatprep.subr.mxu0 0.0
    %1289 = vmatpush1.msra.mxu0 0.0
    %1290 = vmatprep.subr.mxu0 0.0
    %1291 = vmatpush1.msra.mxu0 0.0
    %1292 = vmatprep.subr.mxu0 0.0
    %1293 = vmatpush1.msra.mxu0 0.0
    %1294 = vmatprep.subr.mxu0 0.0
    %1295 = vmatpush1.msra.mxu0 0.0
    %1296 = vmatprep.subr.mxu0 0.0
    %1297 = vmatpush1.msra.mxu0 0.0
    %1298 = vmatprep.mubr.f32.mxu0 0.0
    %1299 = vmatmul.mubr.f32.gmra.mrb[0].mxu0 %v1232
    %v1300 = vpop.f32.mrb[0].mxu0
    %v1301 = vadd.f32 0.0, %v1300
    %v1302 = vpop.f32.mrb[0].mxu0
    %v1303 = vadd.f32 0.0, %v1302
    %1304 = vdwg.mxu0
    %v1305 = vadd.f32 %v1301, %v1198
    %v1306 = vtanh.pop %v1305
    %v1307 = vmul.f32 %v1306, 0.5
    %v1308 = vadd.f32 %v1307, 0.5
    %v1309 = vmul.f32 %v1308, %v1119
    %1311 = vrot.lane.b32.xlu0 %v1306, 64
    %v1312 = vpop.permute.xlu0 %1311
    %v1314 = vmul.f32 %v1308, %v1312
    %1316 = vrot.lane.b32.xlu0 %v1314, 32
    %v1317 = vpop.permute.xlu0 %1316
    %v1319 = vadd.f32 %v1309, %v1317
    %v1320 = vtanh.pop %v1319
    %1322 = vrot.lane.b32.xlu0 %v1320, 64
    %v1323 = vpop.permute.xlu0 %1322
    %v1325 = vmul.f32 %v1308, %v1323
    %1327 = vrot.lane.b32.xlu0 %v1325, 32
    %v1328 = vpop.permute.xlu0 %1327
    %v1329 = vsel %vm141, %v1328, 0
    %1331 = vmatprep.subr.mxu0 0.0
    %1332 = vmatpush1.msra.mxu0 %v46
    %1333 = vmatprep.subr.mxu0 0.0
    %1334 = vmatpush1.msra.mxu0 %v47
    %1335 = vmatprep.subr.mxu0 0.0
    %1336 = vmatpush1.msra.mxu0 %v48
    %1337 = vmatprep.subr.mxu0 0.0
    %1338 = vmatpush1.msra.mxu0 %v49
    %1339 = vmatprep.subr.mxu0 0.0
    %1340 = vmatpush1.msra.mxu0 0.0
    %1341 = vmatprep.subr.mxu0 0.0
    %1342 = vmatpush1.msra.mxu0 0.0
    %1343 = vmatprep.subr.mxu0 0.0
    %1344 = vmatpush1.msra.mxu0 0.0
    %1345 = vmatprep.subr.mxu0 0.0
    %1346 = vmatpush1.msra.mxu0 0.0
    %1347 = vmatprep.subr.mxu0 0.0
    %1348 = vmatpush1.msra.mxu0 0.0
    %1349 = vmatprep.subr.mxu0 0.0
    %1350 = vmatpush1.msra.mxu0 0.0
    %1351 = vmatprep.subr.mxu0 0.0
    %1352 = vmatpush1.msra.mxu0 0.0
    %1353 = vmatprep.subr.mxu0 0.0
    %1354 = vmatpush1.msra.mxu0 0.0
    %1355 = vmatprep.subr.mxu0 0.0
    %1356 = vmatpush1.msra.mxu0 0.0
    %1357 = vmatprep.subr.mxu0 0.0
    %1358 = vmatpush1.msra.mxu0 0.0
    %1359 = vmatprep.subr.mxu0 0.0
    %1360 = vmatpush1.msra.mxu0 0.0
    %1361 = vmatprep.subr.mxu0 0.0
    %1362 = vmatpush1.msra.mxu0 0.0
    %1363 = vmatprep.subr.mxu0 0.0
    %1364 = vmatpush1.msra.mxu0 0.0
    %1365 = vmatprep.subr.mxu0 0.0
    %1366 = vmatpush1.msra.mxu0 0.0
    %1367 = vmatprep.subr.mxu0 0.0
    %1368 = vmatpush1.msra.mxu0 0.0
    %1369 = vmatprep.subr.mxu0 0.0
    %1370 = vmatpush1.msra.mxu0 0.0
    %1371 = vmatprep.subr.mxu0 0.0
    %1372 = vmatpush1.msra.mxu0 0.0
    %1373 = vmatprep.subr.mxu0 0.0
    %1374 = vmatpush1.msra.mxu0 0.0
    %1375 = vmatprep.subr.mxu0 0.0
    %1376 = vmatpush1.msra.mxu0 0.0
    %1377 = vmatprep.subr.mxu0 0.0
    %1378 = vmatpush1.msra.mxu0 0.0
    %1379 = vmatprep.subr.mxu0 0.0
    %1380 = vmatpush1.msra.mxu0 0.0
    %1381 = vmatprep.subr.mxu0 0.0
    %1382 = vmatpush1.msra.mxu0 0.0
    %1383 = vmatprep.subr.mxu0 0.0
    %1384 = vmatpush1.msra.mxu0 0.0
    %1385 = vmatprep.subr.mxu0 0.0
    %1386 = vmatpush1.msra.mxu0 0.0
    %1387 = vmatprep.subr.mxu0 0.0
    %1388 = vmatpush1.msra.mxu0 0.0
    %1389 = vmatprep.subr.mxu0 0.0
    %1390 = vmatpush1.msra.mxu0 0.0
    %1391 = vmatprep.subr.mxu0 0.0
    %1392 = vmatpush1.msra.mxu0 0.0
    %1393 = vmatprep.subr.mxu0 0.0
    %1394 = vmatpush1.msra.mxu0 0.0
    %1395 = vmatprep.mubr.f32.mxu0 0.0
    %1396 = vmatmul.mubr.f32.gmra.mrb[0].mxu0 %v1329
    %v1397 = vpop.f32.mrb[0].mxu0
    %v1398 = vadd.f32 %v51, %v1397
    %v1399 = vpop.f32.mrb[0].mxu0
    %1400 = vdwg.mxu0
    %v1402 = vrot.slane %v1303, 2
    %v1404 = vadd.f32 %v212, %v1402
    %v1405 = vtanh.pop %v1404
    %v1406 = vmul.f32 %v1405, 0.5
    %v1407 = vadd.f32 %v1406, 0.5
    %v1409 = vrot.slane %v1221, 7
    %v1411 = vmul.f32 %v1407, %v1409
    %1413 = vrot.lane.b32.xlu0 %v1405, 64
    %v1414 = vpop.permute.xlu0 %1413
    %v1416 = vmul.f32 %v1407, %v1414
    %1418 = vrot.lane.b32.xlu0 %v1416, 32
    %v1419 = vpop.permute.xlu0 %1418
    %v1421 = vadd.f32 %v1411, %v1419
    %v1422 = vtanh.pop %v1421
    %1424 = vrot.lane.b32.xlu0 %v1422, 64
    %v1425 = vpop.permute.xlu0 %1424
    %v1427 = vmul.f32 %v1407, %v1425
    %v1429 = vrot.slane %v1427, 6
    %1430 = vrot.lane.b32.xlu0 %v1429, 32
    %v1431 = vpop.permute.xlu0 %1430
    %v1432 = vsel %vm141, %v1431, 0
    %1434 = vmatprep.subr.mxu0 %v53
    %1435 = vmatpush1.msra.mxu0 %v52
    %1436 = vmatprep.subr.mxu0 %v55
    %1437 = vmatpush1.msra.mxu0 %v54
    %1438 = vmatprep.subr.mxu0 %v57
    %1439 = vmatpush1.msra.mxu0 %v56
    %1440 = vmatprep.subr.mxu0 %v59
    %1441 = vmatpush1.msra.mxu0 %v58
    %1442 = vmatprep.subr.mxu0 0.0
    %1443 = vmatpush1.msra.mxu0 0.0
    %1444 = vmatprep.subr.mxu0 0.0
    %1445 = vmatpush1.msra.mxu0 0.0
    %1446 = vmatprep.subr.mxu0 0.0
    %1447 = vmatpush1.msra.mxu0 0.0
    %1448 = vmatprep.subr.mxu0 0.0
    %1449 = vmatpush1.msra.mxu0 0.0
    %1450 = vmatprep.subr.mxu0 0.0
    %1451 = vmatpush1.msra.mxu0 0.0
    %1452 = vmatprep.subr.mxu0 0.0
    %1453 = vmatpush1.msra.mxu0 0.0
    %1454 = vmatprep.subr.mxu0 0.0
    %1455 = vmatpush1.msra.mxu0 0.0
    %1456 = vmatprep.subr.mxu0 0.0
    %1457 = vmatpush1.msra.mxu0 0.0
    %1458 = vmatprep.subr.mxu0 0.0
    %1459 = vmatpush1.msra.mxu0 0.0
    %1460 = vmatprep.subr.mxu0 0.0
    %1461 = vmatpush1.msra.mxu0 0.0
    %1462 = vmatprep.subr.mxu0 0.0
    %1463 = vmatpush1.msra.mxu0 0.0
    %1464 = vmatprep.subr.mxu0 0.0
    %1465 = vmatpush1.msra.mxu0 0.0
    %1466 = vmatprep.subr.mxu0 0.0
    %1467 = vmatpush1.msra.mxu0 0.0
    %1468 = vmatprep.subr.mxu0 0.0
    %1469 = vmatpush1.msra.mxu0 0.0
    %1470 = vmatprep.subr.mxu0 0.0
    %1471 = vmatpush1.msra.mxu0 0.0
    %1472 = vmatprep.subr.mxu0 0.0
    %1473 = vmatpush1.msra.mxu0 0.0
    %1474 = vmatprep.subr.mxu0 0.0
    %1475 = vmatpush1.msra.mxu0 0.0
    %1476 = vmatprep.subr.mxu0 0.0
    %1477 = vmatpush1.msra.mxu0 0.0
    %1478 = vmatprep.subr.mxu0 0.0
    %1479 = vmatpush1.msra.mxu0 0.0
    %1480 = vmatprep.subr.mxu0 0.0
    %1481 = vmatpush1.msra.mxu0 0.0
    %1482 = vmatprep.subr.mxu0 0.0
    %1483 = vmatpush1.msra.mxu0 0.0
    %1484 = vmatprep.subr.mxu0 0.0
    %1485 = vmatpush1.msra.mxu0 0.0
    %1486 = vmatprep.subr.mxu0 0.0
    %1487 = vmatpush1.msra.mxu0 0.0
    %1488 = vmatprep.subr.mxu0 0.0
    %1489 = vmatpush1.msra.mxu0 0.0
    %1490 = vmatprep.subr.mxu0 0.0
    %1491 = vmatpush1.msra.mxu0 0.0
    %1492 = vmatprep.subr.mxu0 0.0
    %1493 = vmatpush1.msra.mxu0 0.0
    %1494 = vmatprep.subr.mxu0 0.0
    %1495 = vmatpush1.msra.mxu0 0.0
    %1496 = vmatprep.subr.mxu0 0.0
    %1497 = vmatpush1.msra.mxu0 0.0
    %1498 = vmatprep.mubr.f32.mxu0 0.0
    %1499 = vmatmul.mubr.f32.gmra.mrb[0].mxu0 %v1432
    %v1500 = vpop.f32.mrb[0].mxu0
    %v1501 = vadd.f32 0.0, %v1500
    %v1502 = vpop.f32.mrb[0].mxu0
    %v1503 = vadd.f32 0.0, %v1502
    %1504 = vdwg.mxu0
    %v1505 = vadd.f32 %v1501, %v1398
    %v1506 = vtanh.pop %v1505
    %v1507 = vmul.f32 %v1506, 0.5
    %v1508 = vadd.f32 %v1507, 0.5
    %v1509 = vmul.f32 %v1508, %v1319
    %1511 = vrot.lane.b32.xlu0 %v1506, 64
    %v1512 = vpop.permute.xlu0 %1511
    %v1514 = vmul.f32 %v1508, %v1512
    %1516 = vrot.lane.b32.xlu0 %v1514, 32
    %v1517 = vpop.permute.xlu0 %1516
    %v1519 = vadd.f32 %v1509, %v1517
    %v1520 = vtanh.pop %v1519
    %1522 = vrot.lane.b32.xlu0 %v1520, 64
    %v1523 = vpop.permute.xlu0 %1522
    %v1525 = vmul.f32 %v1508, %v1523
    %1527 = vrot.lane.b32.xlu0 %v1525, 32
    %v1528 = vpop.permute.xlu0 %1527
    %v1529 = vsel %vm141, %v1528, 0
    %1531 = vmatprep.subr.mxu0 0.0
    %1532 = vmatpush1.msra.mxu0 %v46
    %1533 = vmatprep.subr.mxu0 0.0
    %1534 = vmatpush1.msra.mxu0 %v47
    %1535 = vmatprep.subr.mxu0 0.0
    %1536 = vmatpush1.msra.mxu0 %v48
    %1537 = vmatprep.subr.mxu0 0.0
    %1538 = vmatpush1.msra.mxu0 %v49
    %1539 = vmatprep.subr.mxu0 0.0
    %1540 = vmatpush1.msra.mxu0 0.0
    %1541 = vmatprep.subr.mxu0 0.0
    %1542 = vmatpush1.msra.mxu0 0.0
    %1543 = vmatprep.subr.mxu0 0.0
    %1544 = vmatpush1.msra.mxu0 0.0
    %1545 = vmatprep.subr.mxu0 0.0
    %1546 = vmatpush1.msra.mxu0 0.0
    %1547 = vmatprep.subr.mxu0 0.0
    %1548 = vmatpush1.msra.mxu0 0.0
    %1549 = vmatprep.subr.mxu0 0.0
    %1550 = vmatpush1.msra.mxu0 0.0
    %1551 = vmatprep.subr.mxu0 0.0
    %1552 = vmatpush1.msra.mxu0 0.0
    %1553 = vmatprep.subr.mxu0 0.0
    %1554 = vmatpush1.msra.mxu0 0.0
    %1555 = vmatprep.subr.mxu0 0.0
    %1556 = vmatpush1.msra.mxu0 0.0
    %1557 = vmatprep.subr.mxu0 0.0
    %1558 = vmatpush1.msra.mxu0 0.0
    %1559 = vmatprep.subr.mxu0 0.0
    %1560 = vmatpush1.msra.mxu0 0.0
    %1561 = vmatprep.subr.mxu0 0.0
    %1562 = vmatpush1.msra.mxu0 0.0
    %1563 = vmatprep.subr.mxu0 0.0
    %1564 = vmatpush1.msra.mxu0 0.0
    %1565 = vmatprep.subr.mxu0 0.0
    %1566 = vmatpush1.msra.mxu0 0.0
    %1567 = vmatprep.subr.mxu0 0.0
    %1568 = vmatpush1.msra.mxu0 0.0
    %1569 = vmatprep.subr.mxu0 0.0
    %1570 = vmatpush1.msra.mxu0 0.0
    %1571 = vmatprep.subr.mxu0 0.0
    %1572 = vmatpush1.msra.mxu0 0.0
    %1573 = vmatprep.subr.mxu0 0.0
    %1574 = vmatpush1.msra.mxu0 0.0
    %1575 = vmatprep.subr.mxu0 0.0
    %1576 = vmatpush1.msra.mxu0 0.0
    %1577 = vmatprep.subr.mxu0 0.0
    %1578 = vmatpush1.msra.mxu0 0.0
    %1579 = vmatprep.subr.mxu0 0.0
    %1580 = vmatpush1.msra.mxu0 0.0
    %1581 = vmatprep.subr.mxu0 0.0
    %1582 = vmatpush1.msra.mxu0 0.0
    %1583 = vmatprep.subr.mxu0 0.0
    %1584 = vmatpush1.msra.mxu0 0.0
    %1585 = vmatprep.subr.mxu0 0.0
    %1586 = vmatpush1.msra.mxu0 0.0
    %1587 = vmatprep.subr.mxu0 0.0
    %1588 = vmatpush1.msra.mxu0 0.0
    %1589 = vmatprep.subr.mxu0 0.0
    %1590 = vmatpush1.msra.mxu0 0.0
    %1591 = vmatprep.subr.mxu0 0.0
    %1592 = vmatpush1.msra.mxu0 0.0
    %1593 = vmatprep.subr.mxu0 0.0
    %1594 = vmatpush1.msra.mxu0 0.0
    %1595 = vmatprep.mubr.f32.mxu0 0.0
    %1596 = vmatmul.mubr.f32.gmra.mrb[0].mxu0 %v1529
    %v1597 = vpop.f32.mrb[0].mxu0
    %v1598 = vadd.f32 %v51, %v1597
    %v1599 = vpop.f32.mrb[0].mxu0
    %1600 = vdwg.mxu0
    %v1602 = vrot.slane %v1503, 1
    %v1604 = vadd.f32 %v212, %v1602
    %v1605 = vtanh.pop %v1604
    %v1606 = vmul.f32 %v1605, 0.5
    %v1607 = vadd.f32 %v1606, 0.5
    %v1609 = vrot.slane %v1421, 7
    %v1611 = vmul.f32 %v1607, %v1609
    %1613 = vrot.lane.b32.xlu0 %v1605, 64
    %v1614 = vpop.permute.xlu0 %1613
    %v1616 = vmul.f32 %v1607, %v1614
    %1618 = vrot.lane.b32.xlu0 %v1616, 32
    %v1619 = vpop.permute.xlu0 %1618
    %v1621 = vadd.f32 %v1611, %v1619
    %v1622 = vtanh.pop %v1621
    %1624 = vrot.lane.b32.xlu0 %v1622, 64
    %v1625 = vpop.permute.xlu0 %1624
    %v1627 = vmul.f32 %v1607, %v1625
    %v1629 = vrot.slane %v1627, 7
    %1630 = vrot.lane.b32.xlu0 %v1629, 32
    %v1631 = vpop.permute.xlu0 %1630
    %v1632 = vsel %vm141, %v1631, 0
    %1634 = vmatprep.subr.mxu0 %v53
    %1635 = vmatpush1.msra.mxu0 %v52
    %1636 = vmatprep.subr.mxu0 %v55
    %1637 = vmatpush1.msra.mxu0 %v54
    %1638 = vmatprep.subr.mxu0 %v57
    %1639 = vmatpush1.msra.mxu0 %v56
    %1640 = vmatprep.subr.mxu0 %v59
    %1641 = vmatpush1.msra.mxu0 %v58
    %1642 = vmatprep.subr.mxu0 0.0
    %1643 = vmatpush1.msra.mxu0 0.0
    %1644 = vmatprep.subr.mxu0 0.0
    %1645 = vmatpush1.msra.mxu0 0.0
    %1646 = vmatprep.subr.mxu0 0.0
    %1647 = vmatpush1.msra.mxu0 0.0
    %1648 = vmatprep.subr.mxu0 0.0
    %1649 = vmatpush1.msra.mxu0 0.0
    %1650 = vmatprep.subr.mxu0 0.0
    %1651 = vmatpush1.msra.mxu0 0.0
    %1652 = vmatprep.subr.mxu0 0.0
    %1653 = vmatpush1.msra.mxu0 0.0
    %1654 = vmatprep.subr.mxu0 0.0
    %1655 = vmatpush1.msra.mxu0 0.0
    %1656 = vmatprep.subr.mxu0 0.0
    %1657 = vmatpush1.msra.mxu0 0.0
    %1658 = vmatprep.subr.mxu0 0.0
    %1659 = vmatpush1.msra.mxu0 0.0
    %1660 = vmatprep.subr.mxu0 0.0
    %1661 = vmatpush1.msra.mxu0 0.0
    %1662 = vmatprep.subr.mxu0 0.0
    %1663 = vmatpush1.msra.mxu0 0.0
    %1664 = vmatprep.subr.mxu0 0.0
    %1665 = vmatpush1.msra.mxu0 0.0
    %1666 = vmatprep.subr.mxu0 0.0
    %1667 = vmatpush1.msra.mxu0 0.0
    %1668 = vmatprep.subr.mxu0 0.0
    %1669 = vmatpush1.msra.mxu0 0.0
    %1670 = vmatprep.subr.mxu0 0.0
    %1671 = vmatpush1.msra.mxu0 0.0
    %1672 = vmatprep.subr.mxu0 0.0
    %1673 = vmatpush1.msra.mxu0 0.0
    %1674 = vmatprep.subr.mxu0 0.0
    %1675 = vmatpush1.msra.mxu0 0.0
    %1676 = vmatprep.subr.mxu0 0.0
    %1677 = vmatpush1.msra.mxu0 0.0
    %1678 = vmatprep.subr.mxu0 0.0
    %1679 = vmatpush1.msra.mxu0 0.0
    %1680 = vmatprep.subr.mxu0 0.0
    %1681 = vmatpush1.msra.mxu0 0.0
    %1682 = vmatprep.subr.mxu0 0.0
    %1683 = vmatpush1.msra.mxu0 0.0
    %1684 = vmatprep.subr.mxu0 0.0
    %1685 = vmatpush1.msra.mxu0 0.0
    %1686 = vmatprep.subr.mxu0 0.0
    %1687 = vmatpush1.msra.mxu0 0.0
    %1688 = vmatprep.subr.mxu0 0.0
    %1689 = vmatpush1.msra.mxu0 0.0
    %1690 = vmatprep.subr.mxu0 0.0
    %1691 = vmatpush1.msra.mxu0 0.0
    %1692 = vmatprep.subr.mxu0 0.0
    %1693 = vmatpush1.msra.mxu0 0.0
    %1694 = vmatprep.subr.mxu0 0.0
    %1695 = vmatpush1.msra.mxu0 0.0
    %1696 = vmatprep.subr.mxu0 0.0
    %1697 = vmatpush1.msra.mxu0 0.0
    %1698 = vmatprep.mubr.f32.mxu0 0.0
    %1699 = vmatmul.mubr.f32.gmra.mrb[0].mxu0 %v1632
    %v1700 = vpop.f32.mrb[0].mxu0
    %v1701 = vadd.f32 0.0, %v1700
    %v1702 = vpop.f32.mrb[0].mxu0
    %1703 = vdwg.mxu0
    %v1704 = vadd.f32 %v1701, %v1598
    %v1705 = vtanh.pop %v1704
    %v1706 = vmul.f32 %v1705, 0.5
    %v1707 = vadd.f32 %v1706, 0.5
    %v1708 = vmul.f32 %v1707, %v1519
    %1710 = vrot.lane.b32.xlu0 %v1705, 64
    %v1711 = vpop.permute.xlu0 %1710
    %v1713 = vmul.f32 %v1707, %v1711
    %1715 = vrot.lane.b32.xlu0 %v1713, 32
    %v1716 = vpop.permute.xlu0 %1715
    %v1718 = vadd.f32 %v1708, %v1716
    %v1719 = vtanh.pop %v1718
    %1721 = vrot.lane.b32.xlu0 %v1719, 64
    %v1722 = vpop.permute.xlu0 %1721
    %v1724 = vmul.f32 %v1707, %v1722
    %v1725 = vrot.slane %v525, 7
    %v1727 = vrot.slane %v725, 6
    %v1729 = vrot.slane %v925, 5
    %v1731 = vrot.slane %v1125, 4
    %v1733 = vrot.slane %v1325, 3
    %v1735 = vrot.slane %v1525, 2
    %v1738 = vrot.slane %v1724, 1
    %vm1740 = vcmask 1040384
    %v1741 = vsel %vm1740, %v319, %v1725
    %vm1742 = vcmask 1041408
    %v1743 = vsel %vm1742, %v1741, %v1727
    %vm1744 = vcmask 1042432
    %v1745 = vsel %vm1744, %v1743, %v1729
    %vm1746 = vcmask 1043456
    %v1747 = vsel %vm1746, %v1745, %v1731
    %vm1748 = vcmask 1044480
    %v1749 = vsel %vm1748, %v1747, %v1733
    %vm1750 = vcmask 1045504
    %v1751 = vsel %vm1750, %v1749, %v1735
    %vm1752 = vcmask 1046528
    %v1753 = vsel %vm1752, %v1751, %v1738
    %1755 = vrot.lane.b32.xlu0 %v1753, 32
    %v1756 = vpop.permute.xlu0 %1755
    %v1757 = vsel %vm141, %v1756, 0
    %1759 = vmatprep.subr.mxu0 0.0
    %1760 = vmatpush1.msra.mxu0 %v60
    %1761 = vmatprep.subr.mxu0 0.0
    %1762 = vmatpush1.msra.mxu0 %v61
    %1763 = vmatprep.subr.mxu0 0.0
    %1764 = vmatpush1.msra.mxu0 %v62
    %1765 = vmatprep.subr.mxu0 0.0
    %1766 = vmatpush1.msra.mxu0 %v63
    %1767 = vmatprep.subr.mxu0 0.0
    %1768 = vmatpush1.msra.mxu0 0.0
    %1769 = vmatprep.subr.mxu0 0.0
    %1770 = vmatpush1.msra.mxu0 0.0
    %1771 = vmatprep.subr.mxu0 0.0
    %1772 = vmatpush1.msra.mxu0 0.0
    %1773 = vmatprep.subr.mxu0 0.0
    %1774 = vmatpush1.msra.mxu0 0.0
    %1775 = vmatprep.subr.mxu0 0.0
    %1776 = vmatpush1.msra.mxu0 0.0
    %1777 = vmatprep.subr.mxu0 0.0
    %1778 = vmatpush1.msra.mxu0 0.0
    %1779 = vmatprep.subr.mxu0 0.0
    %1780 = vmatpush1.msra.mxu0 0.0
    %1781 = vmatprep.subr.mxu0 0.0
    %1782 = vmatpush1.msra.mxu0 0.0
    %1783 = vmatprep.subr.mxu0 0.0
    %1784 = vmatpush1.msra.mxu0 0.0
    %1785 = vmatprep.subr.mxu0 0.0
    %1786 = vmatpush1.msra.mxu0 0.0
    %1787 = vmatprep.subr.mxu0 0.0
    %1788 = vmatpush1.msra.mxu0 0.0
    %1789 = vmatprep.subr.mxu0 0.0
    %1790 = vmatpush1.msra.mxu0 0.0
    %1791 = vmatprep.subr.mxu0 0.0
    %1792 = vmatpush1.msra.mxu0 0.0
    %1793 = vmatprep.subr.mxu0 0.0
    %1794 = vmatpush1.msra.mxu0 0.0
    %1795 = vmatprep.subr.mxu0 0.0
    %1796 = vmatpush1.msra.mxu0 0.0
    %1797 = vmatprep.subr.mxu0 0.0
    %1798 = vmatpush1.msra.mxu0 0.0
    %1799 = vmatprep.subr.mxu0 0.0
    %1800 = vmatpush1.msra.mxu0 0.0
    %1801 = vmatprep.subr.mxu0 0.0
    %1802 = vmatpush1.msra.mxu0 0.0
    %1803 = vmatprep.subr.mxu0 0.0
    %1804 = vmatpush1.msra.mxu0 0.0
    %1805 = vmatprep.subr.mxu0 0.0
    %1806 = vmatpush1.msra.mxu0 0.0
    %1807 = vmatprep.subr.mxu0 0.0
    %1808 = vmatpush1.msra.mxu0 0.0
    %1809 = vmatprep.subr.mxu0 0.0
    %1810 = vmatpush1.msra.mxu0 0.0
    %1811 = vmatprep.subr.mxu0 0.0
    %1812 = vmatpush1.msra.mxu0 0.0
    %1813 = vmatprep.subr.mxu0 0.0
    %1814 = vmatpush1.msra.mxu0 0.0
    %1815 = vmatprep.subr.mxu0 0.0
    %1816 = vmatpush1.msra.mxu0 0.0
    %1817 = vmatprep.subr.mxu0 0.0
    %1818 = vmatpush1.msra.mxu0 0.0
    %1819 = vmatprep.subr.mxu0 0.0
    %1820 = vmatpush1.msra.mxu0 0.0
    %1821 = vmatprep.subr.mxu0 0.0
    %1822 = vmatpush1.msra.mxu0 0.0
    %1823 = vmatprep.mubr.f32.mxu0 0.0
    %1824 = vmatmul.mubr.f32.gmra.mrb[0].mxu0 %v1757
    %v1825 = vpop.f32.mrb[0].mxu0
    %v1826 = vadd.f32 %v64, %v1825
    %v1827 = vpop.f32.mrb[0].mxu0
    %1828 = vdwg.mxu0
    %1829 = vst [vmem:[#allocation7] sm:$0xff] %v1826
    // Predicated region
    $region18: #{tpu_custom_call.1} parent=1 // pred_check
      _
    $region19: #{tpu_custom_call.1} parent=1 // pred_check_branch
      %1831 = sbr.rel (0) target = $region21
    $region20: #{tpu_custom_call.1} parent=1 // pred_region
      %s1833 = ssub.s32 128, 128
      %1834 = vsyncadd [#allocation4], %s1833
      %s1836 = sshll.u32 [#allocation7], 4
      %s1837 = int_to_ptr.vmem [resolvable:$true] %s1836
      %1839 = dma.vmem_to_hbm [thread:$0]  %s1837, 128, %s2, [#allocation4]
    $region21: #{tpu_custom_call.1} parent=1 // pred_fallthru
      _
    // Predicated region
    $region22: #{tpu_custom_call.1} parent=1 // pred_check
      _
    $region23: #{tpu_custom_call.1} parent=1 // pred_check_branch
      %1841 = sbr.rel (0) target = $region25
    $region24: #{tpu_custom_call.1} parent=1 // pred_region
      %1842 = dma.done [#allocation4], 128
    $region25: #{tpu_custom_call.1} parent=1 // pred_fallthru
      _
    %1843 = vsyncpa [#allocation3], 1
    %1844 = vsyncpa [#allocation6], 1
    %1845 = vsyncpa [#allocation4], 1

</llo_original>
